<compile_context>
chip_gen: v6e
topology: v6e:2x2x1
jax: 0.10.0
libtpu: 0.0.40
codegen_flags: <defaults>
</compile_context>

<pallas_src>
import jax
import jax.numpy as jnp
from jax.experimental import pallas as pl
from jax.experimental.pallas import tpu as pltpu

# ---- model hyperparameters implied by the module ------------------------------
IN_CH = 3
OUT_CH = 32
KSIZE = 200
STRIDE = 50
L_IN = 1000                                   # (1000 - 200)//50 + 1 = 17
L_OUT = (L_IN - KSIZE) // STRIDE + 1          # 17
FLAT = OUT_CH * L_OUT                         # 544 == linear1.in_features
HID = 256
OUT_DIM = 5                                   # small action space (output_dim)
BATCH = 2


# ---- fused Pallas kernel -------------------------------------------------------
def dqn_fused_kernel(p_ref, cw_ref, cb_ref, w1_ref, b1_ref, w2_ref, b2_ref,
                     w3_ref, b3_ref, w4_ref, b4_ref, wo_ref, bo_ref, o_ref):
    """Entire forward pass, everything VMEM resident.

    p_ref : (L_OUT*B, IN_CH*KSIZE) bf16  im2col patches; row = l*B + b,
                                         col = c*KSIZE + k (channel-major).
    cw_ref: (IN_CH*KSIZE, OUT_CH)  bf16  conv weight matching patch columns.
    w1_ref: (FLAT, HID)            bf16  rows permuted offline to l*OUT_CH + c,
                                         folding torch's channel-major flatten.
    biases: (1, N) float32.
    """
    b = o_ref.shape[0]

    # --- Conv1d as a single MXU matmul (+ bias + ReLU): (17B,600)@(600,32) ---
    conv = jnp.dot(p_ref[...], cw_ref[...], preferred_element_type=jnp.float32)
    conv = jnp.maximum(conv + cb_ref[...], 0.0)          # (L_OUT*B, 32) f32

    # --- linear1 with the flatten folded in: sum over spatial positions l of
    #     conv_rows(l)  (B,32)  @  w1_rows(l)  (32,HID).  Total weight pushed is
    #     exactly w1 once; no transpose / reshape of activations is needed. ---
    acc = None
    for l in range(L_OUT):
        blk = conv[l * b:(l + 1) * b, :].astype(jnp.bfloat16)        # (B, 32)
        w1_blk = w1_ref[l * OUT_CH:(l + 1) * OUT_CH, :]              # (32, HID)
        part = jnp.dot(blk, w1_blk, preferred_element_type=jnp.float32)
        acc = part if acc is None else acc + part
    h = jnp.maximum(acc + b1_ref[...], 0.0).astype(jnp.bfloat16)     # (B, HID)

    # --- linear2..linear4 (+ReLU) and output head, all bf16 x bf16 -> f32 ---
    h = jnp.maximum(jnp.dot(h, w2_ref[...], preferred_element_type=jnp.float32)
                    + b2_ref[...], 0.0).astype(jnp.bfloat16)
    h = jnp.maximum(jnp.dot(h, w3_ref[...], preferred_element_type=jnp.float32)
                    + b3_ref[...], 0.0).astype(jnp.bfloat16)
    h = jnp.maximum(jnp.dot(h, w4_ref[...], preferred_element_type=jnp.float32)
                    + b4_ref[...], 0.0).astype(jnp.bfloat16)
    o_ref[...] = (jnp.dot(h, wo_ref[...], preferred_element_type=jnp.float32)
                  + bo_ref[...]).astype(o_ref.dtype)


_VMEM = pl.BlockSpec(memory_space=pltpu.MemorySpace.VMEM)   # whole array in VMEM


# ---- wrapper -------------------------------------------------------------------
def dqn_forward(x, kparams):
    """x: (B, 3, 1000) float32 (NCL, like PyTorch Conv1d input)."""
    (cw, cb, w1p, b1, w2, b2, w3, b3, w4, b4, wo, bo) = kparams
    B = x.shape[0]
    # im2col glue (single XLA gather): rows ordered (l, b), channel-major cols.
    idx = jnp.arange(L_OUT)[:, None] * STRIDE + jnp.arange(KSIZE)[None, :]
    patches = jnp.transpose(x[:, :, idx], (2, 0, 1, 3))              # (L,B,C,K)
    patches = patches.reshape(L_OUT * B, IN_CH * KSIZE).astype(jnp.bfloat16)

    return pl.pallas_call(
        dqn_fused_kernel,
        out_shape=jax.ShapeDtypeStruct((B, OUT_DIM), jnp.float32),
        in_specs=[_VMEM] * 13,
        out_specs=_VMEM,
    )(patches, cw, cb, w1p, b1, w2, b2, w3, b3, w4, b4, wo, bo)


# ---- deterministic parameter init (PyTorch layouts, float32) --------------------
def init_params(key):
    ks = jax.random.split(key, 12)

    def uni(k, fan_in, shape):
        bound = 1.0 / jnp.sqrt(fan_in)
        return jax.random.uniform(k, shape, jnp.float32, -bound, bound)

    conv_w = uni(ks[0], IN_CH * KSIZE, (OUT_CH, IN_CH, KSIZE))   # torch (O,C,K)
    conv_b = uni(ks[1], IN_CH * KSIZE, (OUT_CH,))
    w1 = uni(ks[2], FLAT, (FLAT, HID));   b1 = uni(ks[3], FLAT, (HID,))
    w2 = uni(ks[4], HID, (HID, HID));     b2 = uni(ks[5], HID, (HID,))
    w3 = uni(ks[6], HID, (HID, HID));     b3 = uni(ks[7], HID, (HID,))
    w4 = uni(ks[8], HID, (HID, HID));     b4 = uni(ks[9], HID, (HID,))
    wo = uni(ks[10], HID, (HID, OUT_DIM)); bo = uni(ks[11], HID, (OUT_DIM,))
    return (conv_w, conv_b, w1, b1, w2, b2, w3, b3, w4, b4, wo, bo)


def prepare_kernel_params(params):
    """Offline, one-time layout prep: bf16 weights, (1,N) f32 biases, conv weight
    as (600,32) matching the im2col columns, and w1 rows permuted from the torch
    channel-major flatten order (c*17+l) to the kernel order (l*32+c)."""
    (conv_w, conv_b, w1, b1, w2, b2, w3, b3, w4, b4, wo, bo) = params
    cw = conv_w.reshape(OUT_CH, IN_CH * KSIZE).T.astype(jnp.bfloat16)
    cb = conv_b.reshape(1, OUT_CH).astype(jnp.float32)
    w1p = (w1.reshape(OUT_CH, L_OUT, HID).transpose(1, 0, 2)
             .reshape(FLAT, HID).astype(jnp.bfloat16))

    def lin(w, bvec):
        return w.astype(jnp.bfloat16), bvec.reshape(1, -1).astype(jnp.float32)

    w2b, b2b = lin(w2, b2); w3b, b3b = lin(w3, b3)
    w4b, b4b = lin(w4, b4); wob, bob = lin(wo, bo)
    return (cw, cb, w1p, b1.reshape(1, HID).astype(jnp.float32),
            w2b, b2b, w3b, b3b, w4b, b4b, wob, bob)


# ---- pure-JAX f32 reference (original layouts, channel-major flatten) ------------
def dqn_reference(x, params):
    (conv_w, conv_b, w1, b1, w2, b2, w3, b3, w4, b4, wo, bo) = params
    B = x.shape[0]
    idx = jnp.arange(L_OUT)[:, None] * STRIDE + jnp.arange(KSIZE)[None, :]
    patches = jnp.transpose(x[:, :, idx], (0, 2, 1, 3)).reshape(B * L_OUT,
                                                                IN_CH * KSIZE)
    conv = jnp.maximum(patches @ conv_w.reshape(OUT_CH, -1).T + conv_b[None, :], 0.0)
    flat = jnp.transpose(conv.reshape(B, L_OUT, OUT_CH), (0, 2, 1)).reshape(B, FLAT)
    h = jnp.maximum(flat @ w1 + b1, 0.0)
    h = jnp.maximum(h @ w2 + b2, 0.0)
    h = jnp.maximum(h @ w3 + b3, 0.0)
    h = jnp.maximum(h @ w4 + b4, 0.0)
    return h @ wo + bo


if __name__ == "__main__":
    key = jax.random.PRNGKey(0)
    k_param, k_x = jax.random.split(key)
    params = init_params(k_param)
    kparams = prepare_kernel_params(params)
    x = jax.random.normal(k_x, (BATCH, IN_CH, L_IN), jnp.float32)   # (2, 3, 1000)

    out = jax.jit(dqn_forward)(x, kparams)
    out = jax.block_until_ready(out)

    ref = dqn_reference(x, params)
    assert out.shape == (BATCH, OUT_DIM)
    # bf16 weights/activations inside the kernel (f32 accumulation) -> loose tol.
    assert jnp.allclose(out.astype(jnp.float32), ref, atol=2e-2, rtol=2e-2), \
        "mismatch vs f32 reference"
    print("KERNEL_OK")
</pallas_src>

<mosaic_0001>
module attributes {stable_mosaic.version = 11 : i64} {
  func.func @dqn_fused_kernel(%arg0: memref<34x600xbf16, #tpu.memory_space<vmem>>, %arg1: memref<600x32xbf16, #tpu.memory_space<vmem>>, %arg2: memref<1x32xf32, #tpu.memory_space<vmem>>, %arg3: memref<544x256xbf16, #tpu.memory_space<vmem>>, %arg4: memref<1x256xf32, #tpu.memory_space<vmem>>, %arg5: memref<256x256xbf16, #tpu.memory_space<vmem>>, %arg6: memref<1x256xf32, #tpu.memory_space<vmem>>, %arg7: memref<256x256xbf16, #tpu.memory_space<vmem>>, %arg8: memref<1x256xf32, #tpu.memory_space<vmem>>, %arg9: memref<256x256xbf16, #tpu.memory_space<vmem>>, %arg10: memref<1x256xf32, #tpu.memory_space<vmem>>, %arg11: memref<256x5xbf16, #tpu.memory_space<vmem>>, %arg12: memref<1x5xf32, #tpu.memory_space<vmem>>, %arg13: memref<2x5xf32, #tpu.memory_space<vmem>>) attributes {dimension_semantics = [], scalar_prefetch = 0 : i64, scratch_operands = 0 : i64, tpu.core_type = #tpu.core_type<tc>} {
    %c0 = arith.constant 0 : index
    %c0_0 = arith.constant 0 : index
    %0 = vector.load %arg0[%c0, %c0_0] : memref<34x600xbf16, #tpu.memory_space<vmem>>, vector<34x600xbf16>
    %c0_1 = arith.constant 0 : index
    %c0_2 = arith.constant 0 : index
    %1 = vector.load %arg1[%c0_1, %c0_2] : memref<600x32xbf16, #tpu.memory_space<vmem>>, vector<600x32xbf16>
    %cst = arith.constant dense<0.000000e+00> : vector<34x32xf32>
    %2 = tpu.matmul %0, %1, %cst {dimension_numbers = #tpu.dot_dimension_numbers<[1], [0], [0], [1], [0, 0, 1, 1], [], []>} : vector<34x600xbf16>, vector<600x32xbf16>, vector<34x32xf32> -> vector<34x32xf32>
    %c0_3 = arith.constant 0 : index
    %c0_4 = arith.constant 0 : index
    %3 = vector.load %arg2[%c0_3, %c0_4] : memref<1x32xf32, #tpu.memory_space<vmem>>, vector<1x32xf32>
    %4 = vector.broadcast %3 : vector<1x32xf32> to vector<34x32xf32>
    %5 = arith.addf %2, %4 : vector<34x32xf32>
    %cst_5 = arith.constant 0.000000e+00 : f32
    %6 = vector.broadcast %cst_5 : f32 to vector<34x32xf32>
    %7 = arith.maximumf %5, %6 : vector<34x32xf32>
    %8 = vector.extract_strided_slice %7 {offsets = [0, 0], sizes = [2, 32], strides = [1, 1]} : vector<34x32xf32> to vector<2x32xf32>
    %9 = arith.truncf %8 : vector<2x32xf32> to vector<2x32xbf16>
    %c0_6 = arith.constant 0 : index
    %c0_7 = arith.constant 0 : index
    %10 = vector.load %arg3[%c0_6, %c0_7] : memref<544x256xbf16, #tpu.memory_space<vmem>>, vector<32x256xbf16>
    %cst_8 = arith.constant dense<0.000000e+00> : vector<2x256xf32>
    %11 = tpu.matmul %9, %10, %cst_8 {dimension_numbers = #tpu.dot_dimension_numbers<[1], [0], [0], [1], [0, 0, 1, 1], [], []>} : vector<2x32xbf16>, vector<32x256xbf16>, vector<2x256xf32> -> vector<2x256xf32>
    %12 = vector.extract_strided_slice %7 {offsets = [2, 0], sizes = [2, 32], strides = [1, 1]} : vector<34x32xf32> to vector<2x32xf32>
    %13 = arith.truncf %12 : vector<2x32xf32> to vector<2x32xbf16>
    %c32 = arith.constant 32 : index
    %c0_9 = arith.constant 0 : index
    %14 = vector.load %arg3[%c32, %c0_9] : memref<544x256xbf16, #tpu.memory_space<vmem>>, vector<32x256xbf16>
    %cst_10 = arith.constant dense<0.000000e+00> : vector<2x256xf32>
    %15 = tpu.matmul %13, %14, %cst_10 {dimension_numbers = #tpu.dot_dimension_numbers<[1], [0], [0], [1], [0, 0, 1, 1], [], []>} : vector<2x32xbf16>, vector<32x256xbf16>, vector<2x256xf32> -> vector<2x256xf32>
    %16 = arith.addf %11, %15 : vector<2x256xf32>
    %17 = vector.extract_strided_slice %7 {offsets = [4, 0], sizes = [2, 32], strides = [1, 1]} : vector<34x32xf32> to vector<2x32xf32>
    %18 = arith.truncf %17 : vector<2x32xf32> to vector<2x32xbf16>
    %c64 = arith.constant 64 : index
    %c0_11 = arith.constant 0 : index
    %19 = vector.load %arg3[%c64, %c0_11] : memref<544x256xbf16, #tpu.memory_space<vmem>>, vector<32x256xbf16>
    %cst_12 = arith.constant dense<0.000000e+00> : vector<2x256xf32>
    %20 = tpu.matmul %18, %19, %cst_12 {dimension_numbers = #tpu.dot_dimension_numbers<[1], [0], [0], [1], [0, 0, 1, 1], [], []>} : vector<2x32xbf16>, vector<32x256xbf16>, vector<2x256xf32> -> vector<2x256xf32>
    %21 = arith.addf %16, %20 : vector<2x256xf32>
    %22 = vector.extract_strided_slice %7 {offsets = [6, 0], sizes = [2, 32], strides = [1, 1]} : vector<34x32xf32> to vector<2x32xf32>
    %23 = arith.truncf %22 : vector<2x32xf32> to vector<2x32xbf16>
    %c96 = arith.constant 96 : index
    %c0_13 = arith.constant 0 : index
    %24 = vector.load %arg3[%c96, %c0_13] : memref<544x256xbf16, #tpu.memory_space<vmem>>, vector<32x256xbf16>
    %cst_14 = arith.constant dense<0.000000e+00> : vector<2x256xf32>
    %25 = tpu.matmul %23, %24, %cst_14 {dimension_numbers = #tpu.dot_dimension_numbers<[1], [0], [0], [1], [0, 0, 1, 1], [], []>} : vector<2x32xbf16>, vector<32x256xbf16>, vector<2x256xf32> -> vector<2x256xf32>
    %26 = arith.addf %21, %25 : vector<2x256xf32>
    %27 = vector.extract_strided_slice %7 {offsets = [8, 0], sizes = [2, 32], strides = [1, 1]} : vector<34x32xf32> to vector<2x32xf32>
    %28 = arith.truncf %27 : vector<2x32xf32> to vector<2x32xbf16>
    %c128 = arith.constant 128 : index
    %c0_15 = arith.constant 0 : index
    %29 = vector.load %arg3[%c128, %c0_15] : memref<544x256xbf16, #tpu.memory_space<vmem>>, vector<32x256xbf16>
    %cst_16 = arith.constant dense<0.000000e+00> : vector<2x256xf32>
    %30 = tpu.matmul %28, %29, %cst_16 {dimension_numbers = #tpu.dot_dimension_numbers<[1], [0], [0], [1], [0, 0, 1, 1], [], []>} : vector<2x32xbf16>, vector<32x256xbf16>, vector<2x256xf32> -> vector<2x256xf32>
    %31 = arith.addf %26, %30 : vector<2x256xf32>
    %32 = vector.extract_strided_slice %7 {offsets = [10, 0], sizes = [2, 32], strides = [1, 1]} : vector<34x32xf32> to vector<2x32xf32>
    %33 = arith.truncf %32 : vector<2x32xf32> to vector<2x32xbf16>
    %c160 = arith.constant 160 : index
    %c0_17 = arith.constant 0 : index
    %34 = vector.load %arg3[%c160, %c0_17] : memref<544x256xbf16, #tpu.memory_space<vmem>>, vector<32x256xbf16>
    %cst_18 = arith.constant dense<0.000000e+00> : vector<2x256xf32>
    %35 = tpu.matmul %33, %34, %cst_18 {dimension_numbers = #tpu.dot_dimension_numbers<[1], [0], [0], [1], [0, 0, 1, 1], [], []>} : vector<2x32xbf16>, vector<32x256xbf16>, vector<2x256xf32> -> vector<2x256xf32>
    %36 = arith.addf %31, %35 : vector<2x256xf32>
    %37 = vector.extract_strided_slice %7 {offsets = [12, 0], sizes = [2, 32], strides = [1, 1]} : vector<34x32xf32> to vector<2x32xf32>
    %38 = arith.truncf %37 : vector<2x32xf32> to vector<2x32xbf16>
    %c192 = arith.constant 192 : index
    %c0_19 = arith.constant 0 : index
    %39 = vector.load %arg3[%c192, %c0_19] : memref<544x256xbf16, #tpu.memory_space<vmem>>, vector<32x256xbf16>
    %cst_20 = arith.constant dense<0.000000e+00> : vector<2x256xf32>
    %40 = tpu.matmul %38, %39, %cst_20 {dimension_numbers = #tpu.dot_dimension_numbers<[1], [0], [0], [1], [0, 0, 1, 1], [], []>} : vector<2x32xbf16>, vector<32x256xbf16>, vector<2x256xf32> -> vector<2x256xf32>
    %41 = arith.addf %36, %40 : vector<2x256xf32>
    %42 = vector.extract_strided_slice %7 {offsets = [14, 0], sizes = [2, 32], strides = [1, 1]} : vector<34x32xf32> to vector<2x32xf32>
    %43 = arith.truncf %42 : vector<2x32xf32> to vector<2x32xbf16>
    %c224 = arith.constant 224 : index
    %c0_21 = arith.constant 0 : index
    %44 = vector.load %arg3[%c224, %c0_21] : memref<544x256xbf16, #tpu.memory_space<vmem>>, vector<32x256xbf16>
    %cst_22 = arith.constant dense<0.000000e+00> : vector<2x256xf32>
    %45 = tpu.matmul %43, %44, %cst_22 {dimension_numbers = #tpu.dot_dimension_numbers<[1], [0], [0], [1], [0, 0, 1, 1], [], []>} : vector<2x32xbf16>, vector<32x256xbf16>, vector<2x256xf32> -> vector<2x256xf32>
    %46 = arith.addf %41, %45 : vector<2x256xf32>
    %47 = vector.extract_strided_slice %7 {offsets = [16, 0], sizes = [2, 32], strides = [1, 1]} : vector<34x32xf32> to vector<2x32xf32>
    %48 = arith.truncf %47 : vector<2x32xf32> to vector<2x32xbf16>
    %c256 = arith.constant 256 : index
    %c0_23 = arith.constant 0 : index
    %49 = vector.load %arg3[%c256, %c0_23] : memref<544x256xbf16, #tpu.memory_space<vmem>>, vector<32x256xbf16>
    %cst_24 = arith.constant dense<0.000000e+00> : vector<2x256xf32>
    %50 = tpu.matmul %48, %49, %cst_24 {dimension_numbers = #tpu.dot_dimension_numbers<[1], [0], [0], [1], [0, 0, 1, 1], [], []>} : vector<2x32xbf16>, vector<32x256xbf16>, vector<2x256xf32> -> vector<2x256xf32>
    %51 = arith.addf %46, %50 : vector<2x256xf32>
    %52 = vector.extract_strided_slice %7 {offsets = [18, 0], sizes = [2, 32], strides = [1, 1]} : vector<34x32xf32> to vector<2x32xf32>
    %53 = arith.truncf %52 : vector<2x32xf32> to vector<2x32xbf16>
    %c288 = arith.constant 288 : index
    %c0_25 = arith.constant 0 : index
    %54 = vector.load %arg3[%c288, %c0_25] : memref<544x256xbf16, #tpu.memory_space<vmem>>, vector<32x256xbf16>
    %cst_26 = arith.constant dense<0.000000e+00> : vector<2x256xf32>
    %55 = tpu.matmul %53, %54, %cst_26 {dimension_numbers = #tpu.dot_dimension_numbers<[1], [0], [0], [1], [0, 0, 1, 1], [], []>} : vector<2x32xbf16>, vector<32x256xbf16>, vector<2x256xf32> -> vector<2x256xf32>
    %56 = arith.addf %51, %55 : vector<2x256xf32>
    %57 = vector.extract_strided_slice %7 {offsets = [20, 0], sizes = [2, 32], strides = [1, 1]} : vector<34x32xf32> to vector<2x32xf32>
    %58 = arith.truncf %57 : vector<2x32xf32> to vector<2x32xbf16>
    %c320 = arith.constant 320 : index
    %c0_27 = arith.constant 0 : index
    %59 = vector.load %arg3[%c320, %c0_27] : memref<544x256xbf16, #tpu.memory_space<vmem>>, vector<32x256xbf16>
    %cst_28 = arith.constant dense<0.000000e+00> : vector<2x256xf32>
    %60 = tpu.matmul %58, %59, %cst_28 {dimension_numbers = #tpu.dot_dimension_numbers<[1], [0], [0], [1], [0, 0, 1, 1], [], []>} : vector<2x32xbf16>, vector<32x256xbf16>, vector<2x256xf32> -> vector<2x256xf32>
    %61 = arith.addf %56, %60 : vector<2x256xf32>
    %62 = vector.extract_strided_slice %7 {offsets = [22, 0], sizes = [2, 32], strides = [1, 1]} : vector<34x32xf32> to vector<2x32xf32>
    %63 = arith.truncf %62 : vector<2x32xf32> to vector<2x32xbf16>
    %c352 = arith.constant 352 : index
    %c0_29 = arith.constant 0 : index
    %64 = vector.load %arg3[%c352, %c0_29] : memref<544x256xbf16, #tpu.memory_space<vmem>>, vector<32x256xbf16>
    %cst_30 = arith.constant dense<0.000000e+00> : vector<2x256xf32>
    %65 = tpu.matmul %63, %64, %cst_30 {dimension_numbers = #tpu.dot_dimension_numbers<[1], [0], [0], [1], [0, 0, 1, 1], [], []>} : vector<2x32xbf16>, vector<32x256xbf16>, vector<2x256xf32> -> vector<2x256xf32>
    %66 = arith.addf %61, %65 : vector<2x256xf32>
    %67 = vector.extract_strided_slice %7 {offsets = [24, 0], sizes = [2, 32], strides = [1, 1]} : vector<34x32xf32> to vector<2x32xf32>
    %68 = arith.truncf %67 : vector<2x32xf32> to vector<2x32xbf16>
    %c384 = arith.constant 384 : index
    %c0_31 = arith.constant 0 : index
    %69 = vector.load %arg3[%c384, %c0_31] : memref<544x256xbf16, #tpu.memory_space<vmem>>, vector<32x256xbf16>
    %cst_32 = arith.constant dense<0.000000e+00> : vector<2x256xf32>
    %70 = tpu.matmul %68, %69, %cst_32 {dimension_numbers = #tpu.dot_dimension_numbers<[1], [0], [0], [1], [0, 0, 1, 1], [], []>} : vector<2x32xbf16>, vector<32x256xbf16>, vector<2x256xf32> -> vector<2x256xf32>
    %71 = arith.addf %66, %70 : vector<2x256xf32>
    %72 = vector.extract_strided_slice %7 {offsets = [26, 0], sizes = [2, 32], strides = [1, 1]} : vector<34x32xf32> to vector<2x32xf32>
    %73 = arith.truncf %72 : vector<2x32xf32> to vector<2x32xbf16>
    %c416 = arith.constant 416 : index
    %c0_33 = arith.constant 0 : index
    %74 = vector.load %arg3[%c416, %c0_33] : memref<544x256xbf16, #tpu.memory_space<vmem>>, vector<32x256xbf16>
    %cst_34 = arith.constant dense<0.000000e+00> : vector<2x256xf32>
    %75 = tpu.matmul %73, %74, %cst_34 {dimension_numbers = #tpu.dot_dimension_numbers<[1], [0], [0], [1], [0, 0, 1, 1], [], []>} : vector<2x32xbf16>, vector<32x256xbf16>, vector<2x256xf32> -> vector<2x256xf32>
    %76 = arith.addf %71, %75 : vector<2x256xf32>
    %77 = vector.extract_strided_slice %7 {offsets = [28, 0], sizes = [2, 32], strides = [1, 1]} : vector<34x32xf32> to vector<2x32xf32>
    %78 = arith.truncf %77 : vector<2x32xf32> to vector<2x32xbf16>
    %c448 = arith.constant 448 : index
    %c0_35 = arith.constant 0 : index
    %79 = vector.load %arg3[%c448, %c0_35] : memref<544x256xbf16, #tpu.memory_space<vmem>>, vector<32x256xbf16>
    %cst_36 = arith.constant dense<0.000000e+00> : vector<2x256xf32>
    %80 = tpu.matmul %78, %79, %cst_36 {dimension_numbers = #tpu.dot_dimension_numbers<[1], [0], [0], [1], [0, 0, 1, 1], [], []>} : vector<2x32xbf16>, vector<32x256xbf16>, vector<2x256xf32> -> vector<2x256xf32>
    %81 = arith.addf %76, %80 : vector<2x256xf32>
    %82 = vector.extract_strided_slice %7 {offsets = [30, 0], sizes = [2, 32], strides = [1, 1]} : vector<34x32xf32> to vector<2x32xf32>
    %83 = arith.truncf %82 : vector<2x32xf32> to vector<2x32xbf16>
    %c480 = arith.constant 480 : index
    %c0_37 = arith.constant 0 : index
    %84 = vector.load %arg3[%c480, %c0_37] : memref<544x256xbf16, #tpu.memory_space<vmem>>, vector<32x256xbf16>
    %cst_38 = arith.constant dense<0.000000e+00> : vector<2x256xf32>
    %85 = tpu.matmul %83, %84, %cst_38 {dimension_numbers = #tpu.dot_dimension_numbers<[1], [0], [0], [1], [0, 0, 1, 1], [], []>} : vector<2x32xbf16>, vector<32x256xbf16>, vector<2x256xf32> -> vector<2x256xf32>
    %86 = arith.addf %81, %85 : vector<2x256xf32>
    %87 = vector.extract_strided_slice %7 {offsets = [32, 0], sizes = [2, 32], strides = [1, 1]} : vector<34x32xf32> to vector<2x32xf32>
    %88 = arith.truncf %87 : vector<2x32xf32> to vector<2x32xbf16>
    %c512 = arith.constant 512 : index
    %c0_39 = arith.constant 0 : index
    %89 = vector.load %arg3[%c512, %c0_39] : memref<544x256xbf16, #tpu.memory_space<vmem>>, vector<32x256xbf16>
    %cst_40 = arith.constant dense<0.000000e+00> : vector<2x256xf32>
    %90 = tpu.matmul %88, %89, %cst_40 {dimension_numbers = #tpu.dot_dimension_numbers<[1], [0], [0], [1], [0, 0, 1, 1], [], []>} : vector<2x32xbf16>, vector<32x256xbf16>, vector<2x256xf32> -> vector<2x256xf32>
    %91 = arith.addf %86, %90 : vector<2x256xf32>
    %c0_41 = arith.constant 0 : index
    %c0_42 = arith.constant 0 : index
    %92 = vector.load %arg4[%c0_41, %c0_42] : memref<1x256xf32, #tpu.memory_space<vmem>>, vector<1x256xf32>
    %93 = vector.broadcast %92 : vector<1x256xf32> to vector<2x256xf32>
    %94 = arith.addf %91, %93 : vector<2x256xf32>
    %cst_43 = arith.constant 0.000000e+00 : f32
    %95 = vector.broadcast %cst_43 : f32 to vector<2x256xf32>
    %96 = arith.maximumf %94, %95 : vector<2x256xf32>
    %97 = arith.truncf %96 : vector<2x256xf32> to vector<2x256xbf16>
    %c0_44 = arith.constant 0 : index
    %c0_45 = arith.constant 0 : index
    %98 = vector.load %arg5[%c0_44, %c0_45] : memref<256x256xbf16, #tpu.memory_space<vmem>>, vector<256x256xbf16>
    %cst_46 = arith.constant dense<0.000000e+00> : vector<2x256xf32>
    %99 = tpu.matmul %97, %98, %cst_46 {dimension_numbers = #tpu.dot_dimension_numbers<[1], [0], [0], [1], [0, 0, 1, 1], [], []>} : vector<2x256xbf16>, vector<256x256xbf16>, vector<2x256xf32> -> vector<2x256xf32>
    %c0_47 = arith.constant 0 : index
    %c0_48 = arith.constant 0 : index
    %100 = vector.load %arg6[%c0_47, %c0_48] : memref<1x256xf32, #tpu.memory_space<vmem>>, vector<1x256xf32>
    %101 = vector.broadcast %100 : vector<1x256xf32> to vector<2x256xf32>
    %102 = arith.addf %99, %101 : vector<2x256xf32>
    %cst_49 = arith.constant 0.000000e+00 : f32
    %103 = vector.broadcast %cst_49 : f32 to vector<2x256xf32>
    %104 = arith.maximumf %102, %103 : vector<2x256xf32>
    %105 = arith.truncf %104 : vector<2x256xf32> to vector<2x256xbf16>
    %c0_50 = arith.constant 0 : index
    %c0_51 = arith.constant 0 : index
    %106 = vector.load %arg7[%c0_50, %c0_51] : memref<256x256xbf16, #tpu.memory_space<vmem>>, vector<256x256xbf16>
    %cst_52 = arith.constant dense<0.000000e+00> : vector<2x256xf32>
    %107 = tpu.matmul %105, %106, %cst_52 {dimension_numbers = #tpu.dot_dimension_numbers<[1], [0], [0], [1], [0, 0, 1, 1], [], []>} : vector<2x256xbf16>, vector<256x256xbf16>, vector<2x256xf32> -> vector<2x256xf32>
    %c0_53 = arith.constant 0 : index
    %c0_54 = arith.constant 0 : index
    %108 = vector.load %arg8[%c0_53, %c0_54] : memref<1x256xf32, #tpu.memory_space<vmem>>, vector<1x256xf32>
    %109 = vector.broadcast %108 : vector<1x256xf32> to vector<2x256xf32>
    %110 = arith.addf %107, %109 : vector<2x256xf32>
    %cst_55 = arith.constant 0.000000e+00 : f32
    %111 = vector.broadcast %cst_55 : f32 to vector<2x256xf32>
    %112 = arith.maximumf %110, %111 : vector<2x256xf32>
    %113 = arith.truncf %112 : vector<2x256xf32> to vector<2x256xbf16>
    %c0_56 = arith.constant 0 : index
    %c0_57 = arith.constant 0 : index
    %114 = vector.load %arg9[%c0_56, %c0_57] : memref<256x256xbf16, #tpu.memory_space<vmem>>, vector<256x256xbf16>
    %cst_58 = arith.constant dense<0.000000e+00> : vector<2x256xf32>
    %115 = tpu.matmul %113, %114, %cst_58 {dimension_numbers = #tpu.dot_dimension_numbers<[1], [0], [0], [1], [0, 0, 1, 1], [], []>} : vector<2x256xbf16>, vector<256x256xbf16>, vector<2x256xf32> -> vector<2x256xf32>
    %c0_59 = arith.constant 0 : index
    %c0_60 = arith.constant 0 : index
    %116 = vector.load %arg10[%c0_59, %c0_60] : memref<1x256xf32, #tpu.memory_space<vmem>>, vector<1x256xf32>
    %117 = vector.broadcast %116 : vector<1x256xf32> to vector<2x256xf32>
    %118 = arith.addf %115, %117 : vector<2x256xf32>
    %cst_61 = arith.constant 0.000000e+00 : f32
    %119 = vector.broadcast %cst_61 : f32 to vector<2x256xf32>
    %120 = arith.maximumf %118, %119 : vector<2x256xf32>
    %121 = arith.truncf %120 : vector<2x256xf32> to vector<2x256xbf16>
    %c0_62 = arith.constant 0 : index
    %c0_63 = arith.constant 0 : index
    %122 = vector.load %arg11[%c0_62, %c0_63] : memref<256x5xbf16, #tpu.memory_space<vmem>>, vector<256x5xbf16>
    %cst_64 = arith.constant dense<0.000000e+00> : vector<2x5xf32>
    %123 = tpu.matmul %121, %122, %cst_64 {dimension_numbers = #tpu.dot_dimension_numbers<[1], [0], [0], [1], [0, 0, 1, 1], [], []>} : vector<2x256xbf16>, vector<256x5xbf16>, vector<2x5xf32> -> vector<2x5xf32>
    %c0_65 = arith.constant 0 : index
    %c0_66 = arith.constant 0 : index
    %124 = vector.load %arg12[%c0_65, %c0_66] : memref<1x5xf32, #tpu.memory_space<vmem>>, vector<1x5xf32>
    %125 = vector.broadcast %124 : vector<1x5xf32> to vector<2x5xf32>
    %126 = arith.addf %123, %125 : vector<2x5xf32>
    %c0_67 = arith.constant 0 : index
    %c0_68 = arith.constant 0 : index
    %127 = vector.load %arg13[%c0_67, %c0_68] : memref<2x5xf32, #tpu.memory_space<vmem>>, vector<2x5xf32>
    tpu.vector_store %arg13[%c0_67, %c0_68], %126 {strides = array<i32>} : memref<2x5xf32, #tpu.memory_space<vmem>>, vector<2x5xf32>,
    return
  }
}

</mosaic_0001>

<llo_original>
// kernel: dqn_forward.1
$region0: #{dqn_forward.1}
  #allocation0 [shape = 'u32[]', space=smem, size = 0x4, offset = 0x4, fixed_abs, tag = 'smem constant byte address 0x4 - core index']
  #allocation1 [shape = 'u32[144,128]{1,0:T(1,128)}', space=vmem, size = 0x12000, scoped, tag = 'internal scratch']
  %s0 = inlined_call_operand.vmem [shape: bf16[34,600], index: 0, kind: input, shape index: {}]
  %s1 = inlined_call_operand.vmem [shape: bf16[600,32], index: 1, kind: input, shape index: {}]
  %s2 = inlined_call_operand.vmem [shape: f32[1,32], index: 2, kind: input, shape index: {}]
  %s3 = inlined_call_operand.vmem [shape: bf16[544,256], index: 3, kind: input, shape index: {}]
  %s4 = inlined_call_operand.vmem [shape: f32[1,256], index: 4, kind: input, shape index: {}]
  %s5 = inlined_call_operand.vmem [shape: bf16[256,256], index: 5, kind: input, shape index: {}]
  %s6 = inlined_call_operand.vmem [shape: f32[1,256], index: 6, kind: input, shape index: {}]
  %s7 = inlined_call_operand.vmem [shape: bf16[256,256], index: 7, kind: input, shape index: {}]
  %s8 = inlined_call_operand.vmem [shape: f32[1,256], index: 8, kind: input, shape index: {}]
  %s9 = inlined_call_operand.vmem [shape: bf16[256,256], index: 9, kind: input, shape index: {}]
  %s10 = inlined_call_operand.vmem [shape: f32[1,256], index: 10, kind: input, shape index: {}]
  %s11 = inlined_call_operand.vmem [shape: bf16[256,5], index: 11, kind: input, shape index: {}]
  %s12 = inlined_call_operand.vmem [shape: f32[1,5], index: 12, kind: input, shape index: {}]
  %s13 = inlined_call_operand.hbm [shape: f32[2,5], index: 13, kind: output, shape index: {}]
  %s14 = sld [smem:[#allocation0]]
  $region62: #{dqn_forward.1} parent=0
    _
  %s16 = ssub.s32 1, %s14
  %s17 = scalar_select 0, %s16, %s14
  $region1: #{dqn_forward.1} parent=0
    #allocation2 [shape = 'u8[1024]{0}', space=vmem, size = 0x400, scoped, tag = 'output window, operand 0, single buffered']
    #allocation3 [shape = 's32[1]{0}', space=sflag, size = 0x4, scoped, tag = 'scoped memory for dqn_forward.1']
    %18 = vsyncpa [#allocation3], 0
    // Predicated region
    $region2: #{dqn_forward.1} parent=1 // pred_check
      _
    $region3: #{dqn_forward.1} parent=1 // pred_check_branch
      %20 = sbr.rel (0) target = $region5
    $region4: #{dqn_forward.1} parent=1 // pred_region
      _
    $region5: #{dqn_forward.1} parent=1 // pred_fallthru
      _
    // Predicated region
    $region6: #{dqn_forward.1} parent=1 // pred_check
      _
    $region7: #{dqn_forward.1} parent=1 // pred_check_branch
      %22 = sbr.rel (0) target = $region9
    $region8: #{dqn_forward.1} parent=1 // pred_region
      _
    $region9: #{dqn_forward.1} parent=1 // pred_fallthru
      _
    // Predicated region
    $region10: #{dqn_forward.1} parent=1 // pred_check
      _
    $region11: #{dqn_forward.1} parent=1 // pred_check_branch
      %24 = sbr.rel (0) target = $region13
    $region12: #{dqn_forward.1} parent=1 // pred_region
      _
    $region13: #{dqn_forward.1} parent=1 // pred_fallthru
      _
    // Predicated region
    $region14: #{dqn_forward.1} parent=1 // pred_check
      _
    $region15: #{dqn_forward.1} parent=1 // pred_check_branch
      %26 = sbr.rel (0) target = $region17
    $region16: #{dqn_forward.1} parent=1 // pred_region
      _
    $region17: #{dqn_forward.1} parent=1 // pred_fallthru
      _
    // Predicated region
    $region18: #{dqn_forward.1} parent=1 // pred_check
      _
    $region19: #{dqn_forward.1} parent=1 // pred_check_branch
      %28 = sbr.rel (0) target = $region21
    $region20: #{dqn_forward.1} parent=1 // pred_region
      _
    $region21: #{dqn_forward.1} parent=1 // pred_fallthru
      _
    // Predicated region
    $region22: #{dqn_forward.1} parent=1 // pred_check
      _
    $region23: #{dqn_forward.1} parent=1 // pred_check_branch
      %30 = sbr.rel (0) target = $region25
    $region24: #{dqn_forward.1} parent=1 // pred_region
      _
    $region25: #{dqn_forward.1} parent=1 // pred_fallthru
      _
    // Predicated region
    $region26: #{dqn_forward.1} parent=1 // pred_check
      _
    $region27: #{dqn_forward.1} parent=1 // pred_check_branch
      %32 = sbr.rel (0) target = $region29
    $region28: #{dqn_forward.1} parent=1 // pred_region
      _
    $region29: #{dqn_forward.1} parent=1 // pred_fallthru
      _
    // Predicated region
    $region30: #{dqn_forward.1} parent=1 // pred_check
      _
    $region31: #{dqn_forward.1} parent=1 // pred_check_branch
      %34 = sbr.rel (0) target = $region33
    $region32: #{dqn_forward.1} parent=1 // pred_region
      _
    $region33: #{dqn_forward.1} parent=1 // pred_fallthru
      _
    // Predicated region
    $region34: #{dqn_forward.1} parent=1 // pred_check
      _
    $region35: #{dqn_forward.1} parent=1 // pred_check_branch
      %36 = sbr.rel (0) target = $region37
    $region36: #{dqn_forward.1} parent=1 // pred_region
      _
    $region37: #{dqn_forward.1} parent=1 // pred_fallthru
      _
    // Predicated region
    $region38: #{dqn_forward.1} parent=1 // pred_check
      _
    $region39: #{dqn_forward.1} parent=1 // pred_check_branch
      %38 = sbr.rel (0) target = $region41
    $region40: #{dqn_forward.1} parent=1 // pred_region
      _
    $region41: #{dqn_forward.1} parent=1 // pred_fallthru
      _
    // Predicated region
    $region42: #{dqn_forward.1} parent=1 // pred_check
      _
    $region43: #{dqn_forward.1} parent=1 // pred_check_branch
      %40 = sbr.rel (0) target = $region45
    $region44: #{dqn_forward.1} parent=1 // pred_region
      _
    $region45: #{dqn_forward.1} parent=1 // pred_fallthru
      _
    // Predicated region
    $region46: #{dqn_forward.1} parent=1 // pred_check
      _
    $region47: #{dqn_forward.1} parent=1 // pred_check_branch
      %42 = sbr.rel (0) target = $region49
    $region48: #{dqn_forward.1} parent=1 // pred_region
      _
    $region49: #{dqn_forward.1} parent=1 // pred_fallthru
      _
    // Predicated region
    $region50: #{dqn_forward.1} parent=1 // pred_check
      _
    $region51: #{dqn_forward.1} parent=1 // pred_check_branch
      %44 = sbr.rel (0) target = $region53
    $region52: #{dqn_forward.1} parent=1 // pred_region
      _
    $region53: #{dqn_forward.1} parent=1 // pred_fallthru
      _
    %v46 = vld [vmem:[%s0] sm:$0xff]
    %v47 = vld [vmem:[%s0 + $0x8] sm:$0xff]
    %v48 = vld [vmem:[%s0 + $0x10] sm:$0xf]
    %v49 = vld [vmem:[%s0 + $0x14] sm:$0xff]
    %v50 = vld [vmem:[%s0 + $0x1c] sm:$0xff]
    %v51 = vld [vmem:[%s0 + $0x24] sm:$0xf]
    %v52 = vld [vmem:[%s0 + $0x28] sm:$0xff]
    %v53 = vld [vmem:[%s0 + $0x30] sm:$0xff]
    %v54 = vld [vmem:[%s0 + $0x38] sm:$0xf]
    %v55 = vld [vmem:[%s0 + $0x3c] sm:$0xff]
    %v56 = vld [vmem:[%s0 + $0x44] sm:$0xff]
    %v57 = vld [vmem:[%s0 + $0x4c] sm:$0xf]
    %v58 = vld [vmem:[%s0 + $0x50] sm:$0x11]
    %v59 = vld [vmem:[%s0 + $0x58] sm:$0x11]
    %v60 = vld [vmem:[%s0 + $0x60] sm:$0x1]
    %v61 = vld [vmem:[%s1] sm:$0xf]
    %v62 = vld [vmem:[%s1 + $0x4] sm:$0xf]
    %v63 = vld [vmem:[%s1 + $0x8] sm:$0xf]
    %v64 = vld [vmem:[%s1 + $0xc] sm:$0xf]
    %v65 = vld [vmem:[%s1 + $0x10] sm:$0xf]
    %v66 = vld [vmem:[%s1 + $0x14] sm:$0xf]
    %v67 = vld [vmem:[%s1 + $0x18] sm:$0xf]
    %v68 = vld [vmem:[%s1 + $0x1c] sm:$0xf]
    %v69 = vld [vmem:[%s1 + $0x20] sm:$0xf]
    %v70 = vld [vmem:[%s1 + $0x24] sm:$0xf]
    %v71 = vld [vmem:[%s1 + $0x28] sm:$0xf]
    %v72 = vld [vmem:[%s1 + $0x2c] sm:$0xf]
    %v73 = vld [vmem:[%s1 + $0x30] sm:$0xf]
    %v74 = vld [vmem:[%s1 + $0x34] sm:$0xf]
    %v75 = vld [vmem:[%s1 + $0x38] sm:$0xf]
    %v76 = vld [vmem:[%s1 + $0x3c] sm:$0xf]
    %v77 = vld [vmem:[%s1 + $0x40] sm:$0xf]
    %v78 = vld [vmem:[%s1 + $0x44] sm:$0xf]
    %v79 = vld [vmem:[%s1 + $0x48] sm:$0xf]
    %v80 = vld [vmem:[%s1 + $0x4c] sm:$0xf]
    %v81 = vld [vmem:[%s1 + $0x50] sm:$0xf]
    %v82 = vld [vmem:[%s1 + $0x54] sm:$0xf]
    %v83 = vld [vmem:[%s1 + $0x58] sm:$0xf]
    %v84 = vld [vmem:[%s1 + $0x5c] sm:$0xf]
    %v85 = vld [vmem:[%s1 + $0x60] sm:$0xf]
    %v86 = vld [vmem:[%s1 + $0x64] sm:$0xf]
    %v87 = vld [vmem:[%s1 + $0x68] sm:$0xf]
    %v88 = vld [vmem:[%s1 + $0x6c] sm:$0xf]
    %v89 = vld [vmem:[%s1 + $0x70] sm:$0xf]
    %v90 = vld [vmem:[%s1 + $0x74] sm:$0xf]
    %v91 = vld [vmem:[%s1 + $0x78] sm:$0xf]
    %v92 = vld [vmem:[%s1 + $0x7c] sm:$0xf]
    %v93 = vld [vmem:[%s1 + $0x80] sm:$0xf]
    %v94 = vld [vmem:[%s1 + $0x84] sm:$0xf]
    %v95 = vld [vmem:[%s1 + $0x88] sm:$0xf]
    %v96 = vld [vmem:[%s1 + $0x8c] sm:$0xf]
    %v97 = vld [vmem:[%s1 + $0x90] sm:$0xf]
    %v98 = vld [vmem:[%s1 + $0x94] sm:$0xf]
    %v99 = vld [vmem:[%s1 + $0x98] sm:$0xf]
    %v100 = vld [vmem:[%s1 + $0x9c] sm:$0xf]
    %v101 = vld [vmem:[%s1 + $0xa0] sm:$0xf]
    %v102 = vld [vmem:[%s1 + $0xa4] sm:$0xf]
    %v103 = vld [vmem:[%s1 + $0xa8] sm:$0xf]
    %v104 = vld [vmem:[%s1 + $0xac] sm:$0xf]
    %v105 = vld [vmem:[%s1 + $0xb0] sm:$0xf]
    %v106 = vld [vmem:[%s1 + $0xb4] sm:$0xf]
    %v107 = vld [vmem:[%s1 + $0xb8] sm:$0xf]
    %v108 = vld [vmem:[%s1 + $0xbc] sm:$0xf]
    %v109 = vld [vmem:[%s1 + $0xc0] sm:$0xf]
    %v110 = vld [vmem:[%s1 + $0xc4] sm:$0xf]
    %v111 = vld [vmem:[%s1 + $0xc8] sm:$0xf]
    %v112 = vld [vmem:[%s1 + $0xcc] sm:$0xf]
    %v113 = vld [vmem:[%s1 + $0xd0] sm:$0xf]
    %v114 = vld [vmem:[%s1 + $0xd4] sm:$0xf]
    %v115 = vld [vmem:[%s1 + $0xd8] sm:$0xf]
    %v116 = vld [vmem:[%s1 + $0xdc] sm:$0xf]
    %v117 = vld [vmem:[%s1 + $0xe0] sm:$0xf]
    %v118 = vld [vmem:[%s1 + $0xe4] sm:$0xf]
    %v119 = vld [vmem:[%s1 + $0xe8] sm:$0xf]
    %v120 = vld [vmem:[%s1 + $0xec] sm:$0xf]
    %v121 = vld [vmem:[%s1 + $0xf0] sm:$0xf]
    %v122 = vld [vmem:[%s1 + $0xf4] sm:$0xf]
    %v123 = vld [vmem:[%s1 + $0xf8] sm:$0xf]
    %v124 = vld [vmem:[%s1 + $0xfc] sm:$0xf]
    %v125 = vld [vmem:[%s1 + $0x100] sm:$0xf]
    %v126 = vld [vmem:[%s1 + $0x104] sm:$0xf]
    %v127 = vld [vmem:[%s1 + $0x108] sm:$0xf]
    %v128 = vld [vmem:[%s1 + $0x10c] sm:$0xf]
    %v129 = vld [vmem:[%s1 + $0x110] sm:$0xf]
    %v130 = vld [vmem:[%s1 + $0x114] sm:$0xf]
    %v131 = vld [vmem:[%s1 + $0x118] sm:$0xf]
    %v132 = vld [vmem:[%s1 + $0x11c] sm:$0xf]
    %v133 = vld [vmem:[%s1 + $0x120] sm:$0xf]
    %v134 = vld [vmem:[%s1 + $0x124] sm:$0xf]
    %v135 = vld [vmem:[%s1 + $0x128] sm:$0xf]
    %v136 = vld [vmem:[%s2] sm:$0x1]
    %v138 = vlaneseq
    %v139 = vshrl.u32 %v138, 7
    %v140 = vsub.s32 0, %v139
    %v141 = vrot.slane %v136, %v140
    %v158 = vunpack.c.l.b16 %v46
    %v159 = vunpack.c.h.b16 %v46
    %v160 = vunpack.c.l.b16 %v47
    %v161 = vunpack.c.h.b16 %v47
    %v162 = vunpack.c.l.b16 %v48
    %v163 = vunpack.c.l.b16 %v49
    %v164 = vunpack.c.h.b16 %v49
    %v165 = vunpack.c.l.b16 %v50
    %v166 = vunpack.c.h.b16 %v50
    %v167 = vunpack.c.l.b16 %v51
    %v168 = vunpack.c.l.b16 %v52
    %v169 = vunpack.c.h.b16 %v52
    %v170 = vunpack.c.l.b16 %v53
    %v171 = vunpack.c.h.b16 %v53
    %v172 = vunpack.c.l.b16 %v54
    %v173 = vunpack.c.l.b16 %v55
    %v174 = vunpack.c.h.b16 %v55
    %v175 = vunpack.c.l.b16 %v56
    %v176 = vunpack.c.h.b16 %v56
    %v177 = vunpack.c.l.b16 %v57
    %v178 = vunpack.c.l.b16 %v58
    %v179 = vunpack.c.h.b16 %v58
    %v180 = vunpack.c.l.b16 %v59
    %v181 = vunpack.c.h.b16 %v59
    %v182 = vunpack.c.l.b16 %v60
    %v183 = vpack.c.b16 %v163, %v158
    %v184 = vpack.c.b16 %v164, %v159
    %v185 = vpack.c.b16 %v165, %v160
    %v186 = vpack.c.b16 %v166, %v161
    %v187 = vpack.c.b16 %v167, %v162
    %v188 = vpack.c.b16 %v173, %v168
    %v189 = vpack.c.b16 %v174, %v169
    %v190 = vpack.c.b16 %v175, %v170
    %v191 = vpack.c.b16 %v176, %v171
    %v192 = vpack.c.b16 %v177, %v172
    %v193 = vpack.c.b16 %v178, %v178
    %v194 = vpack.c.b16 %v179, %v179
    %v195 = vpack.c.b16 %v180, %v180
    %v196 = vpack.c.b16 %v181, %v181
    %v197 = vpack.c.b16 %v182, %v182
    %v285 = vunpack.c.l.b16 %v61
    %v286 = vunpack.c.l.b16 %v62
    %v287 = vunpack.c.l.b16 %v63
    %v288 = vunpack.c.l.b16 %v64
    %v289 = vunpack.c.l.b16 %v65
    %v290 = vunpack.c.l.b16 %v66
    %v291 = vunpack.c.l.b16 %v67
    %v292 = vunpack.c.l.b16 %v68
    %v293 = vunpack.c.l.b16 %v69
    %v294 = vunpack.c.l.b16 %v70
    %v295 = vunpack.c.l.b16 %v71
    %v296 = vunpack.c.l.b16 %v72
    %v297 = vunpack.c.l.b16 %v73
    %v298 = vunpack.c.l.b16 %v74
    %v299 = vunpack.c.l.b16 %v75
    %v300 = vunpack.c.l.b16 %v76
    %v301 = vunpack.c.l.b16 %v77
    %v302 = vunpack.c.l.b16 %v78
    %v303 = vunpack.c.l.b16 %v79
    %v304 = vunpack.c.l.b16 %v80
    %v305 = vunpack.c.l.b16 %v81
    %v306 = vunpack.c.l.b16 %v82
    %v307 = vunpack.c.l.b16 %v83
    %v308 = vunpack.c.l.b16 %v84
    %v309 = vunpack.c.l.b16 %v85
    %v310 = vunpack.c.l.b16 %v86
    %v311 = vunpack.c.l.b16 %v87
    %v312 = vunpack.c.l.b16 %v88
    %v313 = vunpack.c.l.b16 %v89
    %v314 = vunpack.c.l.b16 %v90
    %v315 = vunpack.c.l.b16 %v91
    %v316 = vunpack.c.l.b16 %v92
    %v317 = vunpack.c.l.b16 %v93
    %v318 = vunpack.c.l.b16 %v94
    %v319 = vunpack.c.l.b16 %v95
    %v320 = vunpack.c.l.b16 %v96
    %v321 = vunpack.c.l.b16 %v97
    %v322 = vunpack.c.l.b16 %v98
    %v323 = vunpack.c.l.b16 %v99
    %v324 = vunpack.c.l.b16 %v100
    %v325 = vunpack.c.l.b16 %v101
    %v326 = vunpack.c.l.b16 %v102
    %v327 = vunpack.c.l.b16 %v103
    %v328 = vunpack.c.l.b16 %v104
    %v329 = vunpack.c.l.b16 %v105
    %v330 = vunpack.c.l.b16 %v106
    %v331 = vunpack.c.l.b16 %v107
    %v332 = vunpack.c.l.b16 %v108
    %v333 = vunpack.c.l.b16 %v109
    %v334 = vunpack.c.l.b16 %v110
    %v335 = vunpack.c.l.b16 %v111
    %v336 = vunpack.c.l.b16 %v112
    %v337 = vunpack.c.l.b16 %v113
    %v338 = vunpack.c.l.b16 %v114
    %v339 = vunpack.c.l.b16 %v115
    %v340 = vunpack.c.l.b16 %v116
    %v341 = vunpack.c.l.b16 %v117
    %v342 = vunpack.c.l.b16 %v118
    %v343 = vunpack.c.l.b16 %v119
    %v344 = vunpack.c.l.b16 %v120
    %v345 = vunpack.c.l.b16 %v121
    %v346 = vunpack.c.l.b16 %v122
    %v347 = vunpack.c.l.b16 %v123
    %v348 = vunpack.c.l.b16 %v124
    %v349 = vunpack.c.l.b16 %v125
    %v350 = vunpack.c.l.b16 %v126
    %v351 = vunpack.c.l.b16 %v127
    %v352 = vunpack.c.l.b16 %v128
    %v353 = vunpack.c.l.b16 %v129
    %v354 = vunpack.c.l.b16 %v130
    %v355 = vunpack.c.l.b16 %v131
    %v356 = vunpack.c.l.b16 %v132
    %v357 = vunpack.c.l.b16 %v133
    %v358 = vunpack.c.l.b16 %v134
    %v359 = vunpack.c.l.b16 %v135
    %v360 = vpack.c.b16 %v286, %v285
    %v361 = vpack.c.b16 %v288, %v287
    %v362 = vpack.c.b16 %v290, %v289
    %v363 = vpack.c.b16 %v292, %v291
    %v364 = vpack.c.b16 %v294, %v293
    %v365 = vpack.c.b16 %v296, %v295
    %v366 = vpack.c.b16 %v298, %v297
    %v367 = vpack.c.b16 %v300, %v299
    %v368 = vpack.c.b16 %v302, %v301
    %v369 = vpack.c.b16 %v304, %v303
    %v370 = vpack.c.b16 %v306, %v305
    %v371 = vpack.c.b16 %v308, %v307
    %v372 = vpack.c.b16 %v310, %v309
    %v373 = vpack.c.b16 %v312, %v311
    %v374 = vpack.c.b16 %v314, %v313
    %v375 = vpack.c.b16 %v316, %v315
    %v376 = vpack.c.b16 %v318, %v317
    %v377 = vpack.c.b16 %v320, %v319
    %v378 = vpack.c.b16 %v322, %v321
    %v379 = vpack.c.b16 %v324, %v323
    %v380 = vpack.c.b16 %v326, %v325
    %v381 = vpack.c.b16 %v328, %v327
    %v382 = vpack.c.b16 %v330, %v329
    %v383 = vpack.c.b16 %v332, %v331
    %v384 = vpack.c.b16 %v334, %v333
    %v385 = vpack.c.b16 %v336, %v335
    %v386 = vpack.c.b16 %v338, %v337
    %v387 = vpack.c.b16 %v340, %v339
    %v388 = vpack.c.b16 %v342, %v341
    %v389 = vpack.c.b16 %v344, %v343
    %v390 = vpack.c.b16 %v346, %v345
    %v391 = vpack.c.b16 %v348, %v347
    %v392 = vpack.c.b16 %v350, %v349
    %v393 = vpack.c.b16 %v352, %v351
    %v394 = vpack.c.b16 %v354, %v353
    %v395 = vpack.c.b16 %v356, %v355
    %v396 = vpack.c.b16 %v358, %v357
    %v397 = vpack.c.b16 %v359, %v359
    %vm435 = vcmask 719872
    %v437 = vsel %vm435, %v187, 0
    %v440 = vsel %vm435, %v192, 0
    %v443 = vsel %vm435, %v197, 0
    %vm445 = vcmask 1043456
    %v447 = vsel %vm445, %v397, 0
    %449 = vmatprep.subr.bf16.mxu0 0
    %450 = vmatpush1.bf16.msra.mxu0 %v367
    %451 = vmatprep.subr.bf16.mxu0 0
    %452 = vmatpush1.bf16.msra.mxu0 %v366
    %453 = vmatprep.subr.bf16.mxu0 0
    %454 = vmatpush1.bf16.msra.mxu0 %v365
    %455 = vmatprep.subr.bf16.mxu0 0
    %456 = vmatpush1.bf16.msra.mxu0 %v364
    %457 = vmatprep.subr.bf16.mxu0 0
    %458 = vmatpush1.bf16.msra.mxu0 %v363
    %459 = vmatprep.subr.bf16.mxu0 0
    %460 = vmatpush1.bf16.msra.mxu0 %v362
    %461 = vmatprep.subr.bf16.mxu0 0
    %462 = vmatpush1.bf16.msra.mxu0 %v361
    %463 = vmatprep.subr.bf16.mxu0 0
    %464 = vmatpush1.bf16.msra.mxu0 %v360
    %465 = vmatprep.subr.bf16.mxu0 0
    %466 = vmatpush2.bf16.msra.mxu0 %v375
    %467 = vmatprep.subr.bf16.mxu0 0
    %468 = vmatpush2.bf16.msra.mxu0 %v374
    %469 = vmatprep.subr.bf16.mxu0 0
    %470 = vmatpush2.bf16.msra.mxu0 %v373
    %471 = vmatprep.subr.bf16.mxu0 0
    %472 = vmatpush2.bf16.msra.mxu0 %v372
    %473 = vmatprep.subr.bf16.mxu0 0
    %474 = vmatpush2.bf16.msra.mxu0 %v371
    %475 = vmatprep.subr.bf16.mxu0 0
    %476 = vmatpush2.bf16.msra.mxu0 %v370
    %477 = vmatprep.subr.bf16.mxu0 0
    %478 = vmatpush2.bf16.msra.mxu0 %v369
    %479 = vmatprep.subr.bf16.mxu0 0
    %480 = vmatpush2.bf16.msra.mxu0 %v368
    %481 = vmatprep.mubr.bf16.mxu0 %v184
    %482 = vmatmul.mubr.bf16.gmra.mxu0 %v183
    %v483 = vpop.f32.mrf.mxu0
    %v484 = vadd.f32 %v141, %v483
    %v485 = vpop.f32.mrf.mxu0
    %v486 = vpop.f32.mrf.mxu0
    %v487 = vadd.f32 %v141, %v486
    %v488 = vpop.f32.mrf.mxu0
    %489 = vmatprep.mubr.bf16.mxu0 %v189
    %490 = vmatmul.mubr.bf16.gmra.mxu0 %v188
    %v491 = vpop.f32.mrf.mxu0
    %v492 = vadd.f32 %v141, %v491
    %v493 = vpop.f32.mrf.mxu0
    %v494 = vpop.f32.mrf.mxu0
    %v495 = vadd.f32 %v141, %v494
    %v496 = vpop.f32.mrf.mxu0
    %497 = vmatprep.mubr.bf16.mxu0 %v194
    %498 = vmatmul.mubr.bf16.gmra.mxu0 %v193
    %v499 = vpop.f32.mrf.mxu0
    %v500 = vadd.f32 %v141, %v499
    %v501 = vpop.f32.mrf.mxu0
    %v502 = vpop.f32.mrf.mxu0
    %v503 = vpop.f32.mrf.mxu0
    %504 = vdwg.mxu0
    %505 = vmatprep.subr.bf16.mxu0 0
    %506 = vmatpush1.bf16.msra.mxu0 %v383
    %507 = vmatprep.subr.bf16.mxu0 0
    %508 = vmatpush1.bf16.msra.mxu0 %v382
    %509 = vmatprep.subr.bf16.mxu0 0
    %510 = vmatpush1.bf16.msra.mxu0 %v381
    %511 = vmatprep.subr.bf16.mxu0 0
    %512 = vmatpush1.bf16.msra.mxu0 %v380
    %513 = vmatprep.subr.bf16.mxu0 0
    %514 = vmatpush1.bf16.msra.mxu0 %v379
    %515 = vmatprep.subr.bf16.mxu0 0
    %516 = vmatpush1.bf16.msra.mxu0 %v378
    %517 = vmatprep.subr.bf16.mxu0 0
    %518 = vmatpush1.bf16.msra.mxu0 %v377
    %519 = vmatprep.subr.bf16.mxu0 0
    %520 = vmatpush1.bf16.msra.mxu0 %v376
    %521 = vmatprep.subr.bf16.mxu0 0
    %522 = vmatpush2.bf16.msra.mxu0 %v391
    %523 = vmatprep.subr.bf16.mxu0 0
    %524 = vmatpush2.bf16.msra.mxu0 %v390
    %525 = vmatprep.subr.bf16.mxu0 0
    %526 = vmatpush2.bf16.msra.mxu0 %v389
    %527 = vmatprep.subr.bf16.mxu0 0
    %528 = vmatpush2.bf16.msra.mxu0 %v388
    %529 = vmatprep.subr.bf16.mxu0 0
    %530 = vmatpush2.bf16.msra.mxu0 %v387
    %531 = vmatprep.subr.bf16.mxu0 0
    %532 = vmatpush2.bf16.msra.mxu0 %v386
    %533 = vmatprep.subr.bf16.mxu0 0
    %534 = vmatpush2.bf16.msra.mxu0 %v385
    %535 = vmatprep.subr.bf16.mxu0 0
    %536 = vmatpush2.bf16.msra.mxu0 %v384
    %537 = vmatprep.mubr.bf16.mxu0 %v186
    %538 = vmatmul.mubr.bf16.gmra.mxu0 %v185
    %v539 = vpop.f32.mrf.mxu0
    %v540 = vadd.f32 %v484, %v539
    %v541 = vpop.f32.mrf.mxu0
    %v542 = vpop.f32.mrf.mxu0
    %v543 = vadd.f32 %v487, %v542
    %v544 = vpop.f32.mrf.mxu0
    %545 = vmatprep.mubr.bf16.mxu0 %v191
    %546 = vmatmul.mubr.bf16.gmra.mxu0 %v190
    %v547 = vpop.f32.mrf.mxu0
    %v548 = vadd.f32 %v492, %v547
    %v549 = vpop.f32.mrf.mxu0
    %v550 = vpop.f32.mrf.mxu0
    %v551 = vadd.f32 %v495, %v550
    %v552 = vpop.f32.mrf.mxu0
    %553 = vmatprep.mubr.bf16.mxu0 %v196
    %554 = vmatmul.mubr.bf16.gmra.mxu0 %v195
    %v555 = vpop.f32.mrf.mxu0
    %v556 = vadd.f32 %v500, %v555
    %v557 = vpop.f32.mrf.mxu0
    %v558 = vpop.f32.mrf.mxu0
    %v559 = vpop.f32.mrf.mxu0
    %560 = vdwg.mxu0
    %561 = vmatprep.subr.bf16.mxu0 0
    %562 = vmatpush1.bf16.msra.mxu0 0
    %563 = vmatprep.subr.bf16.mxu0 0
    %564 = vmatpush1.bf16.msra.mxu0 0
    %565 = vmatprep.subr.bf16.mxu0 0
    %566 = vmatpush1.bf16.msra.mxu0 %v447
    %567 = vmatprep.subr.bf16.mxu0 0
    %568 = vmatpush1.bf16.msra.mxu0 %v396
    %569 = vmatprep.subr.bf16.mxu0 0
    %570 = vmatpush1.bf16.msra.mxu0 %v395
    %571 = vmatprep.subr.bf16.mxu0 0
    %572 = vmatpush1.bf16.msra.mxu0 %v394
    %573 = vmatprep.subr.bf16.mxu0 0
    %574 = vmatpush1.bf16.msra.mxu0 %v393
    %575 = vmatprep.subr.bf16.mxu0 0
    %576 = vmatpush1.bf16.msra.mxu0 %v392
    %577 = vmatprep.subr.bf16.mxu0 0
    %578 = vmatpush2.bf16.msra.mxu0 0
    %579 = vmatprep.subr.bf16.mxu0 0
    %580 = vmatpush2.bf16.msra.mxu0 0
    %581 = vmatprep.subr.bf16.mxu0 0
    %582 = vmatpush2.bf16.msra.mxu0 0
    %583 = vmatprep.subr.bf16.mxu0 0
    %584 = vmatpush2.bf16.msra.mxu0 0
    %585 = vmatprep.subr.bf16.mxu0 0
    %586 = vmatpush2.bf16.msra.mxu0 0
    %587 = vmatprep.subr.bf16.mxu0 0
    %588 = vmatpush2.bf16.msra.mxu0 0
    %589 = vmatprep.subr.bf16.mxu0 0
    %590 = vmatpush2.bf16.msra.mxu0 0
    %591 = vmatprep.subr.bf16.mxu0 0
    %592 = vmatpush2.bf16.msra.mxu0 0
    %593 = vmatprep.mubr.bf16.mxu0 0
    %594 = vmatmul.mubr.bf16.gmra.mxu0 %v437
    %v595 = vpop.f32.mrf.mxu0
    %v596 = vadd.f32 %v540, %v595
    %v597 = vpop.f32.mrf.mxu0
    %v598 = vpop.f32.mrf.mxu0
    %v599 = vadd.f32 %v543, %v598
    %v600 = vpop.f32.mrf.mxu0
    %601 = vmatprep.mubr.bf16.mxu0 0
    %602 = vmatmul.mubr.bf16.gmra.mxu0 %v440
    %v603 = vpop.f32.mrf.mxu0
    %v604 = vadd.f32 %v548, %v603
    %v605 = vpop.f32.mrf.mxu0
    %v606 = vpop.f32.mrf.mxu0
    %v607 = vadd.f32 %v551, %v606
    %v608 = vpop.f32.mrf.mxu0
    %609 = vmatprep.mubr.bf16.mxu0 0
    %610 = vmatmul.mubr.bf16.gmra.mxu0 %v443
    %v611 = vpop.f32.mrf.mxu0
    %v612 = vadd.f32 %v556, %v611
    %v613 = vpop.f32.mrf.mxu0
    %v614 = vpop.f32.mrf.mxu0
    %v615 = vpop.f32.mrf.mxu0
    %616 = vdwg.mxu0
    %v617 = vmax.f32 %v596, 0.0
    %v618 = vmax.f32 %v599, 0.0
    %v619 = vmax.f32 %v604, 0.0
    %v620 = vmax.f32 %v607, 0.0
    %v621 = vmax.f32 %v612, 0.0
    %v622 = vpack.c.bf16 %v617, %v617
    %v623 = vld [vmem:[%s3] sm:$0xff]
    %v624 = vld [vmem:[%s3 + $0x8] sm:$0xff]
    %v625 = vld [vmem:[%s3 + $0x10] sm:$0xff]
    %v626 = vld [vmem:[%s3 + $0x18] sm:$0xff]
    %v627 = vld [vmem:[%s3 + $0x20] sm:$0xff]
    %v628 = vld [vmem:[%s3 + $0x28] sm:$0xff]
    %v629 = vld [vmem:[%s3 + $0x30] sm:$0xff]
    %v630 = vld [vmem:[%s3 + $0x38] sm:$0xff]
    %v632 = vrot.slane %v622, 1
    %v637 = vunpack.c.l.b16 %v627
    %v638 = vunpack.c.h.b16 %v627
    %v639 = vunpack.c.l.b16 %v628
    %v640 = vunpack.c.h.b16 %v628
    %v641 = vunpack.c.l.b16 %v629
    %v642 = vunpack.c.h.b16 %v629
    %v643 = vunpack.c.l.b16 %v630
    %v644 = vunpack.c.h.b16 %v630
    %v645 = vpack.c.b16 %v639, %v637
    %v646 = vpack.c.b16 %v640, %v638
    %v647 = vpack.c.b16 %v643, %v641
    %v648 = vpack.c.b16 %v644, %v642
    %vm653 = vcmask 261120
    %v655 = vsel %vm653, %v632, 0
    %657 = vmatprep.subr.bf16.mxu0 0
    %658 = vmatpush1.bf16.msra.mxu0 0
    %659 = vmatprep.subr.bf16.mxu0 0
    %660 = vmatpush1.bf16.msra.mxu0 0
    %661 = vmatprep.subr.bf16.mxu0 0
    %662 = vmatpush1.bf16.msra.mxu0 0
    %663 = vmatprep.subr.bf16.mxu0 0
    %664 = vmatpush1.bf16.msra.mxu0 0
    %665 = vmatprep.subr.bf16.mxu0 0
    %666 = vmatpush1.bf16.msra.mxu0 0
    %667 = vmatprep.subr.bf16.mxu0 0
    %668 = vmatpush1.bf16.msra.mxu0 0
    %669 = vmatprep.subr.bf16.mxu0 %v648
    %670 = vmatpush1.bf16.msra.mxu0 %v647
    %671 = vmatprep.subr.bf16.mxu0 %v646
    %672 = vmatpush1.bf16.msra.mxu0 %v645
    %673 = vmatprep.subr.bf16.mxu0 0
    %674 = vmatpush2.bf16.msra.mxu0 0
    %675 = vmatprep.subr.bf16.mxu0 0
    %676 = vmatpush2.bf16.msra.mxu0 0
    %677 = vmatprep.subr.bf16.mxu0 0
    %678 = vmatpush2.bf16.msra.mxu0 0
    %679 = vmatprep.subr.bf16.mxu0 0
    %680 = vmatpush2.bf16.msra.mxu0 0
    %681 = vmatprep.subr.bf16.mxu0 0
    %682 = vmatpush2.bf16.msra.mxu0 0
    %683 = vmatprep.subr.bf16.mxu0 0
    %684 = vmatpush2.bf16.msra.mxu0 0
    %685 = vmatprep.subr.bf16.mxu0 0
    %686 = vmatpush2.bf16.msra.mxu0 0
    %687 = vmatprep.subr.bf16.mxu0 0
    %688 = vmatpush2.bf16.msra.mxu0 0
    %689 = vmatprep.mubr.bf16.mxu0 0
    %690 = vmatmul.mubr.bf16.gmra.mxu0 %v655
    %v691 = vpop.f32.mrf.mxu0
    %v692 = vadd.f32 0.0, %v691
    %v693 = vpop.f32.mrf.mxu0
    %v694 = vadd.f32 0.0, %v693
    %v695 = vpop.f32.mrf.mxu0
    %v696 = vpop.f32.mrf.mxu0
    %697 = vdwg.mxu0
    %v702 = vunpack.c.l.b16 %v623
    %v703 = vunpack.c.h.b16 %v623
    %v704 = vunpack.c.l.b16 %v624
    %v705 = vunpack.c.h.b16 %v624
    %v706 = vunpack.c.l.b16 %v625
    %v707 = vunpack.c.h.b16 %v625
    %v708 = vunpack.c.l.b16 %v626
    %v709 = vunpack.c.h.b16 %v626
    %v710 = vpack.c.b16 %v704, %v702
    %v711 = vpack.c.b16 %v705, %v703
    %v712 = vpack.c.b16 %v708, %v706
    %v713 = vpack.c.b16 %v709, %v707
    %v719 = vsel %vm653, %v622, 0
    %721 = vmatprep.subr.bf16.mxu0 0
    %722 = vmatpush1.bf16.msra.mxu0 0
    %723 = vmatprep.subr.bf16.mxu0 0
    %724 = vmatpush1.bf16.msra.mxu0 0
    %725 = vmatprep.subr.bf16.mxu0 0
    %726 = vmatpush1.bf16.msra.mxu0 0
    %727 = vmatprep.subr.bf16.mxu0 0
    %728 = vmatpush1.bf16.msra.mxu0 0
    %729 = vmatprep.subr.bf16.mxu0 0
    %730 = vmatpush1.bf16.msra.mxu0 0
    %731 = vmatprep.subr.bf16.mxu0 0
    %732 = vmatpush1.bf16.msra.mxu0 0
    %733 = vmatprep.subr.bf16.mxu0 %v713
    %734 = vmatpush1.bf16.msra.mxu0 %v712
    %735 = vmatprep.subr.bf16.mxu0 %v711
    %736 = vmatpush1.bf16.msra.mxu0 %v710
    %737 = vmatprep.subr.bf16.mxu0 0
    %738 = vmatpush2.bf16.msra.mxu0 0
    %739 = vmatprep.subr.bf16.mxu0 0
    %740 = vmatpush2.bf16.msra.mxu0 0
    %741 = vmatprep.subr.bf16.mxu0 0
    %742 = vmatpush2.bf16.msra.mxu0 0
    %743 = vmatprep.subr.bf16.mxu0 0
    %744 = vmatpush2.bf16.msra.mxu0 0
    %745 = vmatprep.subr.bf16.mxu0 0
    %746 = vmatpush2.bf16.msra.mxu0 0
    %747 = vmatprep.subr.bf16.mxu0 0
    %748 = vmatpush2.bf16.msra.mxu0 0
    %749 = vmatprep.subr.bf16.mxu0 0
    %750 = vmatpush2.bf16.msra.mxu0 0
    %751 = vmatprep.subr.bf16.mxu0 0
    %752 = vmatpush2.bf16.msra.mxu0 0
    %753 = vmatprep.mubr.bf16.mxu0 0
    %754 = vmatmul.mubr.bf16.gmra.mxu0 %v719
    %v755 = vpop.f32.mrf.mxu0
    %v756 = vadd.f32 %v692, %v755
    %v757 = vpop.f32.mrf.mxu0
    %v758 = vadd.f32 %v694, %v757
    %v759 = vpop.f32.mrf.mxu0
    %v760 = vpop.f32.mrf.mxu0
    %761 = vdwg.mxu0
    %v762 = vld [vmem:[%s3 + $0x40] sm:$0xff]
    %v763 = vld [vmem:[%s3 + $0x48] sm:$0xff]
    %v764 = vld [vmem:[%s3 + $0x50] sm:$0xff]
    %v765 = vld [vmem:[%s3 + $0x58] sm:$0xff]
    %v766 = vrot.slane %v622, 2
    %v771 = vunpack.c.l.b16 %v762
    %v772 = vunpack.c.h.b16 %v762
    %v773 = vunpack.c.l.b16 %v763
    %v774 = vunpack.c.h.b16 %v763
    %v775 = vunpack.c.l.b16 %v764
    %v776 = vunpack.c.h.b16 %v764
    %v777 = vunpack.c.l.b16 %v765
    %v778 = vunpack.c.h.b16 %v765
    %v779 = vpack.c.b16 %v773, %v771
    %v780 = vpack.c.b16 %v774, %v772
    %v781 = vpack.c.b16 %v777, %v775
    %v782 = vpack.c.b16 %v778, %v776
    %v788 = vsel %vm653, %v766, 0
    %790 = vmatprep.subr.bf16.mxu0 0
    %791 = vmatpush1.bf16.msra.mxu0 0
    %792 = vmatprep.subr.bf16.mxu0 0
    %793 = vmatpush1.bf16.msra.mxu0 0
    %794 = vmatprep.subr.bf16.mxu0 0
    %795 = vmatpush1.bf16.msra.mxu0 0
    %796 = vmatprep.subr.bf16.mxu0 0
    %797 = vmatpush1.bf16.msra.mxu0 0
    %798 = vmatprep.subr.bf16.mxu0 0
    %799 = vmatpush1.bf16.msra.mxu0 0
    %800 = vmatprep.subr.bf16.mxu0 0
    %801 = vmatpush1.bf16.msra.mxu0 0
    %802 = vmatprep.subr.bf16.mxu0 %v782
    %803 = vmatpush1.bf16.msra.mxu0 %v781
    %804 = vmatprep.subr.bf16.mxu0 %v780
    %805 = vmatpush1.bf16.msra.mxu0 %v779
    %806 = vmatprep.subr.bf16.mxu0 0
    %807 = vmatpush2.bf16.msra.mxu0 0
    %808 = vmatprep.subr.bf16.mxu0 0
    %809 = vmatpush2.bf16.msra.mxu0 0
    %810 = vmatprep.subr.bf16.mxu0 0
    %811 = vmatpush2.bf16.msra.mxu0 0
    %812 = vmatprep.subr.bf16.mxu0 0
    %813 = vmatpush2.bf16.msra.mxu0 0
    %814 = vmatprep.subr.bf16.mxu0 0
    %815 = vmatpush2.bf16.msra.mxu0 0
    %816 = vmatprep.subr.bf16.mxu0 0
    %817 = vmatpush2.bf16.msra.mxu0 0
    %818 = vmatprep.subr.bf16.mxu0 0
    %819 = vmatpush2.bf16.msra.mxu0 0
    %820 = vmatprep.subr.bf16.mxu0 0
    %821 = vmatpush2.bf16.msra.mxu0 0
    %822 = vmatprep.mubr.bf16.mxu0 0
    %823 = vmatmul.mubr.bf16.gmra.mxu0 %v788
    %v824 = vpop.f32.mrf.mxu0
    %v825 = vadd.f32 0.0, %v824
    %v826 = vpop.f32.mrf.mxu0
    %v827 = vadd.f32 0.0, %v826
    %v828 = vpop.f32.mrf.mxu0
    %v829 = vpop.f32.mrf.mxu0
    %830 = vdwg.mxu0
    %v831 = vadd.f32 %v756, %v825
    %v832 = vadd.f32 %v758, %v827
    %v833 = vld [vmem:[%s3 + $0x60] sm:$0xff]
    %v834 = vld [vmem:[%s3 + $0x68] sm:$0xff]
    %v835 = vld [vmem:[%s3 + $0x70] sm:$0xff]
    %v836 = vld [vmem:[%s3 + $0x78] sm:$0xff]
    %v837 = vrot.slane %v622, 3
    %v842 = vunpack.c.l.b16 %v833
    %v843 = vunpack.c.h.b16 %v833
    %v844 = vunpack.c.l.b16 %v834
    %v845 = vunpack.c.h.b16 %v834
    %v846 = vunpack.c.l.b16 %v835
    %v847 = vunpack.c.h.b16 %v835
    %v848 = vunpack.c.l.b16 %v836
    %v849 = vunpack.c.h.b16 %v836
    %v850 = vpack.c.b16 %v844, %v842
    %v851 = vpack.c.b16 %v845, %v843
    %v852 = vpack.c.b16 %v848, %v846
    %v853 = vpack.c.b16 %v849, %v847
    %v859 = vsel %vm653, %v837, 0
    %861 = vmatprep.subr.bf16.mxu0 0
    %862 = vmatpush1.bf16.msra.mxu0 0
    %863 = vmatprep.subr.bf16.mxu0 0
    %864 = vmatpush1.bf16.msra.mxu0 0
    %865 = vmatprep.subr.bf16.mxu0 0
    %866 = vmatpush1.bf16.msra.mxu0 0
    %867 = vmatprep.subr.bf16.mxu0 0
    %868 = vmatpush1.bf16.msra.mxu0 0
    %869 = vmatprep.subr.bf16.mxu0 0
    %870 = vmatpush1.bf16.msra.mxu0 0
    %871 = vmatprep.subr.bf16.mxu0 0
    %872 = vmatpush1.bf16.msra.mxu0 0
    %873 = vmatprep.subr.bf16.mxu0 %v853
    %874 = vmatpush1.bf16.msra.mxu0 %v852
    %875 = vmatprep.subr.bf16.mxu0 %v851
    %876 = vmatpush1.bf16.msra.mxu0 %v850
    %877 = vmatprep.subr.bf16.mxu0 0
    %878 = vmatpush2.bf16.msra.mxu0 0
    %879 = vmatprep.subr.bf16.mxu0 0
    %880 = vmatpush2.bf16.msra.mxu0 0
    %881 = vmatprep.subr.bf16.mxu0 0
    %882 = vmatpush2.bf16.msra.mxu0 0
    %883 = vmatprep.subr.bf16.mxu0 0
    %884 = vmatpush2.bf16.msra.mxu0 0
    %885 = vmatprep.subr.bf16.mxu0 0
    %886 = vmatpush2.bf16.msra.mxu0 0
    %887 = vmatprep.subr.bf16.mxu0 0
    %888 = vmatpush2.bf16.msra.mxu0 0
    %889 = vmatprep.subr.bf16.mxu0 0
    %890 = vmatpush2.bf16.msra.mxu0 0
    %891 = vmatprep.subr.bf16.mxu0 0
    %892 = vmatpush2.bf16.msra.mxu0 0
    %893 = vmatprep.mubr.bf16.mxu0 0
    %894 = vmatmul.mubr.bf16.gmra.mxu0 %v859
    %v895 = vpop.f32.mrf.mxu0
    %v896 = vadd.f32 0.0, %v895
    %v897 = vpop.f32.mrf.mxu0
    %v898 = vadd.f32 0.0, %v897
    %v899 = vpop.f32.mrf.mxu0
    %v900 = vpop.f32.mrf.mxu0
    %901 = vdwg.mxu0
    %v902 = vadd.f32 %v831, %v896
    %v903 = vadd.f32 %v832, %v898
    %v904 = vpack.c.bf16 %v618, %v618
    %v905 = vld [vmem:[%s3 + $0x80] sm:$0xff]
    %v906 = vld [vmem:[%s3 + $0x88] sm:$0xff]
    %v907 = vld [vmem:[%s3 + $0x90] sm:$0xff]
    %v908 = vld [vmem:[%s3 + $0x98] sm:$0xff]
    %v913 = vunpack.c.l.b16 %v905
    %v914 = vunpack.c.h.b16 %v905
    %v915 = vunpack.c.l.b16 %v906
    %v916 = vunpack.c.h.b16 %v906
    %v917 = vunpack.c.l.b16 %v907
    %v918 = vunpack.c.h.b16 %v907
    %v919 = vunpack.c.l.b16 %v908
    %v920 = vunpack.c.h.b16 %v908
    %v921 = vpack.c.b16 %v915, %v913
    %v922 = vpack.c.b16 %v916, %v914
    %v923 = vpack.c.b16 %v919, %v917
    %v924 = vpack.c.b16 %v920, %v918
    %v930 = vsel %vm653, %v904, 0
    %932 = vmatprep.subr.bf16.mxu0 0
    %933 = vmatpush1.bf16.msra.mxu0 0
    %934 = vmatprep.subr.bf16.mxu0 0
    %935 = vmatpush1.bf16.msra.mxu0 0
    %936 = vmatprep.subr.bf16.mxu0 0
    %937 = vmatpush1.bf16.msra.mxu0 0
    %938 = vmatprep.subr.bf16.mxu0 0
    %939 = vmatpush1.bf16.msra.mxu0 0
    %940 = vmatprep.subr.bf16.mxu0 0
    %941 = vmatpush1.bf16.msra.mxu0 0
    %942 = vmatprep.subr.bf16.mxu0 0
    %943 = vmatpush1.bf16.msra.mxu0 0
    %944 = vmatprep.subr.bf16.mxu0 %v924
    %945 = vmatpush1.bf16.msra.mxu0 %v923
    %946 = vmatprep.subr.bf16.mxu0 %v922
    %947 = vmatpush1.bf16.msra.mxu0 %v921
    %948 = vmatprep.subr.bf16.mxu0 0
    %949 = vmatpush2.bf16.msra.mxu0 0
    %950 = vmatprep.subr.bf16.mxu0 0
    %951 = vmatpush2.bf16.msra.mxu0 0
    %952 = vmatprep.subr.bf16.mxu0 0
    %953 = vmatpush2.bf16.msra.mxu0 0
    %954 = vmatprep.subr.bf16.mxu0 0
    %955 = vmatpush2.bf16.msra.mxu0 0
    %956 = vmatprep.subr.bf16.mxu0 0
    %957 = vmatpush2.bf16.msra.mxu0 0
    %958 = vmatprep.subr.bf16.mxu0 0
    %959 = vmatpush2.bf16.msra.mxu0 0
    %960 = vmatprep.subr.bf16.mxu0 0
    %961 = vmatpush2.bf16.msra.mxu0 0
    %962 = vmatprep.subr.bf16.mxu0 0
    %963 = vmatpush2.bf16.msra.mxu0 0
    %964 = vmatprep.mubr.bf16.mxu0 0
    %965 = vmatmul.mubr.bf16.gmra.mxu0 %v930
    %v966 = vpop.f32.mrf.mxu0
    %v967 = vadd.f32 0.0, %v966
    %v968 = vpop.f32.mrf.mxu0
    %v969 = vadd.f32 0.0, %v968
    %v970 = vpop.f32.mrf.mxu0
    %v971 = vpop.f32.mrf.mxu0
    %972 = vdwg.mxu0
    %v973 = vadd.f32 %v902, %v967
    %v974 = vadd.f32 %v903, %v969
    %v975 = vld [vmem:[%s3 + $0xa0] sm:$0xff]
    %v976 = vld [vmem:[%s3 + $0xa8] sm:$0xff]
    %v977 = vld [vmem:[%s3 + $0xb0] sm:$0xff]
    %v978 = vld [vmem:[%s3 + $0xb8] sm:$0xff]
    %v980 = vrot.slane %v904, 1
    %v985 = vunpack.c.l.b16 %v975
    %v986 = vunpack.c.h.b16 %v975
    %v987 = vunpack.c.l.b16 %v976
    %v988 = vunpack.c.h.b16 %v976
    %v989 = vunpack.c.l.b16 %v977
    %v990 = vunpack.c.h.b16 %v977
    %v991 = vunpack.c.l.b16 %v978
    %v992 = vunpack.c.h.b16 %v978
    %v993 = vpack.c.b16 %v987, %v985
    %v994 = vpack.c.b16 %v988, %v986
    %v995 = vpack.c.b16 %v991, %v989
    %v996 = vpack.c.b16 %v992, %v990
    %v1002 = vsel %vm653, %v980, 0
    %1004 = vmatprep.subr.bf16.mxu0 0
    %1005 = vmatpush1.bf16.msra.mxu0 0
    %1006 = vmatprep.subr.bf16.mxu0 0
    %1007 = vmatpush1.bf16.msra.mxu0 0
    %1008 = vmatprep.subr.bf16.mxu0 0
    %1009 = vmatpush1.bf16.msra.mxu0 0
    %1010 = vmatprep.subr.bf16.mxu0 0
    %1011 = vmatpush1.bf16.msra.mxu0 0
    %1012 = vmatprep.subr.bf16.mxu0 0
    %1013 = vmatpush1.bf16.msra.mxu0 0
    %1014 = vmatprep.subr.bf16.mxu0 0
    %1015 = vmatpush1.bf16.msra.mxu0 0
    %1016 = vmatprep.subr.bf16.mxu0 %v996
    %1017 = vmatpush1.bf16.msra.mxu0 %v995
    %1018 = vmatprep.subr.bf16.mxu0 %v994
    %1019 = vmatpush1.bf16.msra.mxu0 %v993
    %1020 = vmatprep.subr.bf16.mxu0 0
    %1021 = vmatpush2.bf16.msra.mxu0 0
    %1022 = vmatprep.subr.bf16.mxu0 0
    %1023 = vmatpush2.bf16.msra.mxu0 0
    %1024 = vmatprep.subr.bf16.mxu0 0
    %1025 = vmatpush2.bf16.msra.mxu0 0
    %1026 = vmatprep.subr.bf16.mxu0 0
    %1027 = vmatpush2.bf16.msra.mxu0 0
    %1028 = vmatprep.subr.bf16.mxu0 0
    %1029 = vmatpush2.bf16.msra.mxu0 0
    %1030 = vmatprep.subr.bf16.mxu0 0
    %1031 = vmatpush2.bf16.msra.mxu0 0
    %1032 = vmatprep.subr.bf16.mxu0 0
    %1033 = vmatpush2.bf16.msra.mxu0 0
    %1034 = vmatprep.subr.bf16.mxu0 0
    %1035 = vmatpush2.bf16.msra.mxu0 0
    %1036 = vmatprep.mubr.bf16.mxu0 0
    %1037 = vmatmul.mubr.bf16.gmra.mxu0 %v1002
    %v1038 = vpop.f32.mrf.mxu0
    %v1039 = vadd.f32 0.0, %v1038
    %v1040 = vpop.f32.mrf.mxu0
    %v1041 = vadd.f32 0.0, %v1040
    %v1042 = vpop.f32.mrf.mxu0
    %v1043 = vpop.f32.mrf.mxu0
    %1044 = vdwg.mxu0
    %v1045 = vadd.f32 %v973, %v1039
    %v1046 = vadd.f32 %v974, %v1041
    %v1047 = vld [vmem:[%s3 + $0xc0] sm:$0xff]
    %v1048 = vld [vmem:[%s3 + $0xc8] sm:$0xff]
    %v1049 = vld [vmem:[%s3 + $0xd0] sm:$0xff]
    %v1050 = vld [vmem:[%s3 + $0xd8] sm:$0xff]
    %v1051 = vrot.slane %v904, 2
    %v1056 = vunpack.c.l.b16 %v1047
    %v1057 = vunpack.c.h.b16 %v1047
    %v1058 = vunpack.c.l.b16 %v1048
    %v1059 = vunpack.c.h.b16 %v1048
    %v1060 = vunpack.c.l.b16 %v1049
    %v1061 = vunpack.c.h.b16 %v1049
    %v1062 = vunpack.c.l.b16 %v1050
    %v1063 = vunpack.c.h.b16 %v1050
    %v1064 = vpack.c.b16 %v1058, %v1056
    %v1065 = vpack.c.b16 %v1059, %v1057
    %v1066 = vpack.c.b16 %v1062, %v1060
    %v1067 = vpack.c.b16 %v1063, %v1061
    %v1073 = vsel %vm653, %v1051, 0
    %1075 = vmatprep.subr.bf16.mxu0 0
    %1076 = vmatpush1.bf16.msra.mxu0 0
    %1077 = vmatprep.subr.bf16.mxu0 0
    %1078 = vmatpush1.bf16.msra.mxu0 0
    %1079 = vmatprep.subr.bf16.mxu0 0
    %1080 = vmatpush1.bf16.msra.mxu0 0
    %1081 = vmatprep.subr.bf16.mxu0 0
    %1082 = vmatpush1.bf16.msra.mxu0 0
    %1083 = vmatprep.subr.bf16.mxu0 0
    %1084 = vmatpush1.bf16.msra.mxu0 0
    %1085 = vmatprep.subr.bf16.mxu0 0
    %1086 = vmatpush1.bf16.msra.mxu0 0
    %1087 = vmatprep.subr.bf16.mxu0 %v1067
    %1088 = vmatpush1.bf16.msra.mxu0 %v1066
    %1089 = vmatprep.subr.bf16.mxu0 %v1065
    %1090 = vmatpush1.bf16.msra.mxu0 %v1064
    %1091 = vmatprep.subr.bf16.mxu0 0
    %1092 = vmatpush2.bf16.msra.mxu0 0
    %1093 = vmatprep.subr.bf16.mxu0 0
    %1094 = vmatpush2.bf16.msra.mxu0 0
    %1095 = vmatprep.subr.bf16.mxu0 0
    %1096 = vmatpush2.bf16.msra.mxu0 0
    %1097 = vmatprep.subr.bf16.mxu0 0
    %1098 = vmatpush2.bf16.msra.mxu0 0
    %1099 = vmatprep.subr.bf16.mxu0 0
    %1100 = vmatpush2.bf16.msra.mxu0 0
    %1101 = vmatprep.subr.bf16.mxu0 0
    %1102 = vmatpush2.bf16.msra.mxu0 0
    %1103 = vmatprep.subr.bf16.mxu0 0
    %1104 = vmatpush2.bf16.msra.mxu0 0
    %1105 = vmatprep.subr.bf16.mxu0 0
    %1106 = vmatpush2.bf16.msra.mxu0 0
    %1107 = vmatprep.mubr.bf16.mxu0 0
    %1108 = vmatmul.mubr.bf16.gmra.mxu0 %v1073
    %v1109 = vpop.f32.mrf.mxu0
    %v1110 = vadd.f32 0.0, %v1109
    %v1111 = vpop.f32.mrf.mxu0
    %v1112 = vadd.f32 0.0, %v1111
    %v1113 = vpop.f32.mrf.mxu0
    %v1114 = vpop.f32.mrf.mxu0
    %1115 = vdwg.mxu0
    %v1116 = vadd.f32 %v1045, %v1110
    %v1117 = vadd.f32 %v1046, %v1112
    %v1118 = vld [vmem:[%s3 + $0xe0] sm:$0xff]
    %v1119 = vld [vmem:[%s3 + $0xe8] sm:$0xff]
    %v1120 = vld [vmem:[%s3 + $0xf0] sm:$0xff]
    %v1121 = vld [vmem:[%s3 + $0xf8] sm:$0xff]
    %v1122 = vrot.slane %v904, 3
    %v1127 = vunpack.c.l.b16 %v1118
    %v1128 = vunpack.c.h.b16 %v1118
    %v1129 = vunpack.c.l.b16 %v1119
    %v1130 = vunpack.c.h.b16 %v1119
    %v1131 = vunpack.c.l.b16 %v1120
    %v1132 = vunpack.c.h.b16 %v1120
    %v1133 = vunpack.c.l.b16 %v1121
    %v1134 = vunpack.c.h.b16 %v1121
    %v1135 = vpack.c.b16 %v1129, %v1127
    %v1136 = vpack.c.b16 %v1130, %v1128
    %v1137 = vpack.c.b16 %v1133, %v1131
    %v1138 = vpack.c.b16 %v1134, %v1132
    %v1144 = vsel %vm653, %v1122, 0
    %1146 = vmatprep.subr.bf16.mxu0 0
    %1147 = vmatpush1.bf16.msra.mxu0 0
    %1148 = vmatprep.subr.bf16.mxu0 0
    %1149 = vmatpush1.bf16.msra.mxu0 0
    %1150 = vmatprep.subr.bf16.mxu0 0
    %1151 = vmatpush1.bf16.msra.mxu0 0
    %1152 = vmatprep.subr.bf16.mxu0 0
    %1153 = vmatpush1.bf16.msra.mxu0 0
    %1154 = vmatprep.subr.bf16.mxu0 0
    %1155 = vmatpush1.bf16.msra.mxu0 0
    %1156 = vmatprep.subr.bf16.mxu0 0
    %1157 = vmatpush1.bf16.msra.mxu0 0
    %1158 = vmatprep.subr.bf16.mxu0 %v1138
    %1159 = vmatpush1.bf16.msra.mxu0 %v1137
    %1160 = vmatprep.subr.bf16.mxu0 %v1136
    %1161 = vmatpush1.bf16.msra.mxu0 %v1135
    %1162 = vmatprep.subr.bf16.mxu0 0
    %1163 = vmatpush2.bf16.msra.mxu0 0
    %1164 = vmatprep.subr.bf16.mxu0 0
    %1165 = vmatpush2.bf16.msra.mxu0 0
    %1166 = vmatprep.subr.bf16.mxu0 0
    %1167 = vmatpush2.bf16.msra.mxu0 0
    %1168 = vmatprep.subr.bf16.mxu0 0
    %1169 = vmatpush2.bf16.msra.mxu0 0
    %1170 = vmatprep.subr.bf16.mxu0 0
    %1171 = vmatpush2.bf16.msra.mxu0 0
    %1172 = vmatprep.subr.bf16.mxu0 0
    %1173 = vmatpush2.bf16.msra.mxu0 0
    %1174 = vmatprep.subr.bf16.mxu0 0
    %1175 = vmatpush2.bf16.msra.mxu0 0
    %1176 = vmatprep.subr.bf16.mxu0 0
    %1177 = vmatpush2.bf16.msra.mxu0 0
    %1178 = vmatprep.mubr.bf16.mxu0 0
    %1179 = vmatmul.mubr.bf16.gmra.mxu0 %v1144
    %v1180 = vpop.f32.mrf.mxu0
    %v1181 = vadd.f32 0.0, %v1180
    %v1182 = vpop.f32.mrf.mxu0
    %v1183 = vadd.f32 0.0, %v1182
    %v1184 = vpop.f32.mrf.mxu0
    %v1185 = vpop.f32.mrf.mxu0
    %1186 = vdwg.mxu0
    %v1187 = vadd.f32 %v1116, %v1181
    %v1188 = vadd.f32 %v1117, %v1183
    %v1189 = vpack.c.bf16 %v619, %v619
    %v1190 = vld [vmem:[%s3 + $0x100] sm:$0xff]
    %v1191 = vld [vmem:[%s3 + $0x108] sm:$0xff]
    %v1192 = vld [vmem:[%s3 + $0x110] sm:$0xff]
    %v1193 = vld [vmem:[%s3 + $0x118] sm:$0xff]
    %v1198 = vunpack.c.l.b16 %v1190
    %v1199 = vunpack.c.h.b16 %v1190
    %v1200 = vunpack.c.l.b16 %v1191
    %v1201 = vunpack.c.h.b16 %v1191
    %v1202 = vunpack.c.l.b16 %v1192
    %v1203 = vunpack.c.h.b16 %v1192
    %v1204 = vunpack.c.l.b16 %v1193
    %v1205 = vunpack.c.h.b16 %v1193
    %v1206 = vpack.c.b16 %v1200, %v1198
    %v1207 = vpack.c.b16 %v1201, %v1199
    %v1208 = vpack.c.b16 %v1204, %v1202
    %v1209 = vpack.c.b16 %v1205, %v1203
    %v1215 = vsel %vm653, %v1189, 0
    %1217 = vmatprep.subr.bf16.mxu0 0
    %1218 = vmatpush1.bf16.msra.mxu0 0
    %1219 = vmatprep.subr.bf16.mxu0 0
    %1220 = vmatpush1.bf16.msra.mxu0 0
    %1221 = vmatprep.subr.bf16.mxu0 0
    %1222 = vmatpush1.bf16.msra.mxu0 0
    %1223 = vmatprep.subr.bf16.mxu0 0
    %1224 = vmatpush1.bf16.msra.mxu0 0
    %1225 = vmatprep.subr.bf16.mxu0 0
    %1226 = vmatpush1.bf16.msra.mxu0 0
    %1227 = vmatprep.subr.bf16.mxu0 0
    %1228 = vmatpush1.bf16.msra.mxu0 0
    %1229 = vmatprep.subr.bf16.mxu0 %v1209
    %1230 = vmatpush1.bf16.msra.mxu0 %v1208
    %1231 = vmatprep.subr.bf16.mxu0 %v1207
    %1232 = vmatpush1.bf16.msra.mxu0 %v1206
    %1233 = vmatprep.subr.bf16.mxu0 0
    %1234 = vmatpush2.bf16.msra.mxu0 0
    %1235 = vmatprep.subr.bf16.mxu0 0
    %1236 = vmatpush2.bf16.msra.mxu0 0
    %1237 = vmatprep.subr.bf16.mxu0 0
    %1238 = vmatpush2.bf16.msra.mxu0 0
    %1239 = vmatprep.subr.bf16.mxu0 0
    %1240 = vmatpush2.bf16.msra.mxu0 0
    %1241 = vmatprep.subr.bf16.mxu0 0
    %1242 = vmatpush2.bf16.msra.mxu0 0
    %1243 = vmatprep.subr.bf16.mxu0 0
    %1244 = vmatpush2.bf16.msra.mxu0 0
    %1245 = vmatprep.subr.bf16.mxu0 0
    %1246 = vmatpush2.bf16.msra.mxu0 0
    %1247 = vmatprep.subr.bf16.mxu0 0
    %1248 = vmatpush2.bf16.msra.mxu0 0
    %1249 = vmatprep.mubr.bf16.mxu0 0
    %1250 = vmatmul.mubr.bf16.gmra.mxu0 %v1215
    %v1251 = vpop.f32.mrf.mxu0
    %v1252 = vadd.f32 0.0, %v1251
    %v1253 = vpop.f32.mrf.mxu0
    %v1254 = vadd.f32 0.0, %v1253
    %v1255 = vpop.f32.mrf.mxu0
    %v1256 = vpop.f32.mrf.mxu0
    %1257 = vdwg.mxu0
    %v1258 = vadd.f32 %v1187, %v1252
    %v1259 = vadd.f32 %v1188, %v1254
    %v1260 = vld [vmem:[%s3 + $0x120] sm:$0xff]
    %v1261 = vld [vmem:[%s3 + $0x128] sm:$0xff]
    %v1262 = vld [vmem:[%s3 + $0x130] sm:$0xff]
    %v1263 = vld [vmem:[%s3 + $0x138] sm:$0xff]
    %v1265 = vrot.slane %v1189, 1
    %v1270 = vunpack.c.l.b16 %v1260
    %v1271 = vunpack.c.h.b16 %v1260
    %v1272 = vunpack.c.l.b16 %v1261
    %v1273 = vunpack.c.h.b16 %v1261
    %v1274 = vunpack.c.l.b16 %v1262
    %v1275 = vunpack.c.h.b16 %v1262
    %v1276 = vunpack.c.l.b16 %v1263
    %v1277 = vunpack.c.h.b16 %v1263
    %v1278 = vpack.c.b16 %v1272, %v1270
    %v1279 = vpack.c.b16 %v1273, %v1271
    %v1280 = vpack.c.b16 %v1276, %v1274
    %v1281 = vpack.c.b16 %v1277, %v1275
    %v1287 = vsel %vm653, %v1265, 0
    %1289 = vmatprep.subr.bf16.mxu0 0
    %1290 = vmatpush1.bf16.msra.mxu0 0
    %1291 = vmatprep.subr.bf16.mxu0 0
    %1292 = vmatpush1.bf16.msra.mxu0 0
    %1293 = vmatprep.subr.bf16.mxu0 0
    %1294 = vmatpush1.bf16.msra.mxu0 0
    %1295 = vmatprep.subr.bf16.mxu0 0
    %1296 = vmatpush1.bf16.msra.mxu0 0
    %1297 = vmatprep.subr.bf16.mxu0 0
    %1298 = vmatpush1.bf16.msra.mxu0 0
    %1299 = vmatprep.subr.bf16.mxu0 0
    %1300 = vmatpush1.bf16.msra.mxu0 0
    %1301 = vmatprep.subr.bf16.mxu0 %v1281
    %1302 = vmatpush1.bf16.msra.mxu0 %v1280
    %1303 = vmatprep.subr.bf16.mxu0 %v1279
    %1304 = vmatpush1.bf16.msra.mxu0 %v1278
    %1305 = vmatprep.subr.bf16.mxu0 0
    %1306 = vmatpush2.bf16.msra.mxu0 0
    %1307 = vmatprep.subr.bf16.mxu0 0
    %1308 = vmatpush2.bf16.msra.mxu0 0
    %1309 = vmatprep.subr.bf16.mxu0 0
    %1310 = vmatpush2.bf16.msra.mxu0 0
    %1311 = vmatprep.subr.bf16.mxu0 0
    %1312 = vmatpush2.bf16.msra.mxu0 0
    %1313 = vmatprep.subr.bf16.mxu0 0
    %1314 = vmatpush2.bf16.msra.mxu0 0
    %1315 = vmatprep.subr.bf16.mxu0 0
    %1316 = vmatpush2.bf16.msra.mxu0 0
    %1317 = vmatprep.subr.bf16.mxu0 0
    %1318 = vmatpush2.bf16.msra.mxu0 0
    %1319 = vmatprep.subr.bf16.mxu0 0
    %1320 = vmatpush2.bf16.msra.mxu0 0
    %1321 = vmatprep.mubr.bf16.mxu0 0
    %1322 = vmatmul.mubr.bf16.gmra.mxu0 %v1287
    %v1323 = vpop.f32.mrf.mxu0
    %v1324 = vadd.f32 0.0, %v1323
    %v1325 = vpop.f32.mrf.mxu0
    %v1326 = vadd.f32 0.0, %v1325
    %v1327 = vpop.f32.mrf.mxu0
    %v1328 = vpop.f32.mrf.mxu0
    %1329 = vdwg.mxu0
    %v1330 = vadd.f32 %v1258, %v1324
    %v1331 = vadd.f32 %v1259, %v1326
    %v1332 = vld [vmem:[%s3 + $0x140] sm:$0xff]
    %v1333 = vld [vmem:[%s3 + $0x148] sm:$0xff]
    %v1334 = vld [vmem:[%s3 + $0x150] sm:$0xff]
    %v1335 = vld [vmem:[%s3 + $0x158] sm:$0xff]
    %v1336 = vrot.slane %v1189, 2
    %v1341 = vunpack.c.l.b16 %v1332
    %v1342 = vunpack.c.h.b16 %v1332
    %v1343 = vunpack.c.l.b16 %v1333
    %v1344 = vunpack.c.h.b16 %v1333
    %v1345 = vunpack.c.l.b16 %v1334
    %v1346 = vunpack.c.h.b16 %v1334
    %v1347 = vunpack.c.l.b16 %v1335
    %v1348 = vunpack.c.h.b16 %v1335
    %v1349 = vpack.c.b16 %v1343, %v1341
    %v1350 = vpack.c.b16 %v1344, %v1342
    %v1351 = vpack.c.b16 %v1347, %v1345
    %v1352 = vpack.c.b16 %v1348, %v1346
    %v1358 = vsel %vm653, %v1336, 0
    %1360 = vmatprep.subr.bf16.mxu0 0
    %1361 = vmatpush1.bf16.msra.mxu0 0
    %1362 = vmatprep.subr.bf16.mxu0 0
    %1363 = vmatpush1.bf16.msra.mxu0 0
    %1364 = vmatprep.subr.bf16.mxu0 0
    %1365 = vmatpush1.bf16.msra.mxu0 0
    %1366 = vmatprep.subr.bf16.mxu0 0
    %1367 = vmatpush1.bf16.msra.mxu0 0
    %1368 = vmatprep.subr.bf16.mxu0 0
    %1369 = vmatpush1.bf16.msra.mxu0 0
    %1370 = vmatprep.subr.bf16.mxu0 0
    %1371 = vmatpush1.bf16.msra.mxu0 0
    %1372 = vmatprep.subr.bf16.mxu0 %v1352
    %1373 = vmatpush1.bf16.msra.mxu0 %v1351
    %1374 = vmatprep.subr.bf16.mxu0 %v1350
    %1375 = vmatpush1.bf16.msra.mxu0 %v1349
    %1376 = vmatprep.subr.bf16.mxu0 0
    %1377 = vmatpush2.bf16.msra.mxu0 0
    %1378 = vmatprep.subr.bf16.mxu0 0
    %1379 = vmatpush2.bf16.msra.mxu0 0
    %1380 = vmatprep.subr.bf16.mxu0 0
    %1381 = vmatpush2.bf16.msra.mxu0 0
    %1382 = vmatprep.subr.bf16.mxu0 0
    %1383 = vmatpush2.bf16.msra.mxu0 0
    %1384 = vmatprep.subr.bf16.mxu0 0
    %1385 = vmatpush2.bf16.msra.mxu0 0
    %1386 = vmatprep.subr.bf16.mxu0 0
    %1387 = vmatpush2.bf16.msra.mxu0 0
    %1388 = vmatprep.subr.bf16.mxu0 0
    %1389 = vmatpush2.bf16.msra.mxu0 0
    %1390 = vmatprep.subr.bf16.mxu0 0
    %1391 = vmatpush2.bf16.msra.mxu0 0
    %1392 = vmatprep.mubr.bf16.mxu0 0
    %1393 = vmatmul.mubr.bf16.gmra.mxu0 %v1358
    %v1394 = vpop.f32.mrf.mxu0
    %v1395 = vadd.f32 0.0, %v1394
    %v1396 = vpop.f32.mrf.mxu0
    %v1397 = vadd.f32 0.0, %v1396
    %v1398 = vpop.f32.mrf.mxu0
    %v1399 = vpop.f32.mrf.mxu0
    %1400 = vdwg.mxu0
    %v1401 = vadd.f32 %v1330, %v1395
    %v1402 = vadd.f32 %v1331, %v1397
    %v1403 = vld [vmem:[%s3 + $0x160] sm:$0xff]
    %v1404 = vld [vmem:[%s3 + $0x168] sm:$0xff]
    %v1405 = vld [vmem:[%s3 + $0x170] sm:$0xff]
    %v1406 = vld [vmem:[%s3 + $0x178] sm:$0xff]
    %v1407 = vrot.slane %v1189, 3
    %v1412 = vunpack.c.l.b16 %v1403
    %v1413 = vunpack.c.h.b16 %v1403
    %v1414 = vunpack.c.l.b16 %v1404
    %v1415 = vunpack.c.h.b16 %v1404
    %v1416 = vunpack.c.l.b16 %v1405
    %v1417 = vunpack.c.h.b16 %v1405
    %v1418 = vunpack.c.l.b16 %v1406
    %v1419 = vunpack.c.h.b16 %v1406
    %v1420 = vpack.c.b16 %v1414, %v1412
    %v1421 = vpack.c.b16 %v1415, %v1413
    %v1422 = vpack.c.b16 %v1418, %v1416
    %v1423 = vpack.c.b16 %v1419, %v1417
    %v1429 = vsel %vm653, %v1407, 0
    %1431 = vmatprep.subr.bf16.mxu0 0
    %1432 = vmatpush1.bf16.msra.mxu0 0
    %1433 = vmatprep.subr.bf16.mxu0 0
    %1434 = vmatpush1.bf16.msra.mxu0 0
    %1435 = vmatprep.subr.bf16.mxu0 0
    %1436 = vmatpush1.bf16.msra.mxu0 0
    %1437 = vmatprep.subr.bf16.mxu0 0
    %1438 = vmatpush1.bf16.msra.mxu0 0
    %1439 = vmatprep.subr.bf16.mxu0 0
    %1440 = vmatpush1.bf16.msra.mxu0 0
    %1441 = vmatprep.subr.bf16.mxu0 0
    %1442 = vmatpush1.bf16.msra.mxu0 0
    %1443 = vmatprep.subr.bf16.mxu0 %v1423
    %1444 = vmatpush1.bf16.msra.mxu0 %v1422
    %1445 = vmatprep.subr.bf16.mxu0 %v1421
    %1446 = vmatpush1.bf16.msra.mxu0 %v1420
    %1447 = vmatprep.subr.bf16.mxu0 0
    %1448 = vmatpush2.bf16.msra.mxu0 0
    %1449 = vmatprep.subr.bf16.mxu0 0
    %1450 = vmatpush2.bf16.msra.mxu0 0
    %1451 = vmatprep.subr.bf16.mxu0 0
    %1452 = vmatpush2.bf16.msra.mxu0 0
    %1453 = vmatprep.subr.bf16.mxu0 0
    %1454 = vmatpush2.bf16.msra.mxu0 0
    %1455 = vmatprep.subr.bf16.mxu0 0
    %1456 = vmatpush2.bf16.msra.mxu0 0
    %1457 = vmatprep.subr.bf16.mxu0 0
    %1458 = vmatpush2.bf16.msra.mxu0 0
    %1459 = vmatprep.subr.bf16.mxu0 0
    %1460 = vmatpush2.bf16.msra.mxu0 0
    %1461 = vmatprep.subr.bf16.mxu0 0
    %1462 = vmatpush2.bf16.msra.mxu0 0
    %1463 = vmatprep.mubr.bf16.mxu0 0
    %1464 = vmatmul.mubr.bf16.gmra.mxu0 %v1429
    %v1465 = vpop.f32.mrf.mxu0
    %v1466 = vadd.f32 0.0, %v1465
    %v1467 = vpop.f32.mrf.mxu0
    %v1468 = vadd.f32 0.0, %v1467
    %v1469 = vpop.f32.mrf.mxu0
    %v1470 = vpop.f32.mrf.mxu0
    %1471 = vdwg.mxu0
    %v1472 = vadd.f32 %v1401, %v1466
    %v1473 = vadd.f32 %v1402, %v1468
    %v1474 = vpack.c.bf16 %v620, %v620
    %v1475 = vld [vmem:[%s3 + $0x180] sm:$0xff]
    %v1476 = vld [vmem:[%s3 + $0x188] sm:$0xff]
    %v1477 = vld [vmem:[%s3 + $0x190] sm:$0xff]
    %v1478 = vld [vmem:[%s3 + $0x198] sm:$0xff]
    %v1483 = vunpack.c.l.b16 %v1475
    %v1484 = vunpack.c.h.b16 %v1475
    %v1485 = vunpack.c.l.b16 %v1476
    %v1486 = vunpack.c.h.b16 %v1476
    %v1487 = vunpack.c.l.b16 %v1477
    %v1488 = vunpack.c.h.b16 %v1477
    %v1489 = vunpack.c.l.b16 %v1478
    %v1490 = vunpack.c.h.b16 %v1478
    %v1491 = vpack.c.b16 %v1485, %v1483
    %v1492 = vpack.c.b16 %v1486, %v1484
    %v1493 = vpack.c.b16 %v1489, %v1487
    %v1494 = vpack.c.b16 %v1490, %v1488
    %v1500 = vsel %vm653, %v1474, 0
    %1502 = vmatprep.subr.bf16.mxu0 0
    %1503 = vmatpush1.bf16.msra.mxu0 0
    %1504 = vmatprep.subr.bf16.mxu0 0
    %1505 = vmatpush1.bf16.msra.mxu0 0
    %1506 = vmatprep.subr.bf16.mxu0 0
    %1507 = vmatpush1.bf16.msra.mxu0 0
    %1508 = vmatprep.subr.bf16.mxu0 0
    %1509 = vmatpush1.bf16.msra.mxu0 0
    %1510 = vmatprep.subr.bf16.mxu0 0
    %1511 = vmatpush1.bf16.msra.mxu0 0
    %1512 = vmatprep.subr.bf16.mxu0 0
    %1513 = vmatpush1.bf16.msra.mxu0 0
    %1514 = vmatprep.subr.bf16.mxu0 %v1494
    %1515 = vmatpush1.bf16.msra.mxu0 %v1493
    %1516 = vmatprep.subr.bf16.mxu0 %v1492
    %1517 = vmatpush1.bf16.msra.mxu0 %v1491
    %1518 = vmatprep.subr.bf16.mxu0 0
    %1519 = vmatpush2.bf16.msra.mxu0 0
    %1520 = vmatprep.subr.bf16.mxu0 0
    %1521 = vmatpush2.bf16.msra.mxu0 0
    %1522 = vmatprep.subr.bf16.mxu0 0
    %1523 = vmatpush2.bf16.msra.mxu0 0
    %1524 = vmatprep.subr.bf16.mxu0 0
    %1525 = vmatpush2.bf16.msra.mxu0 0
    %1526 = vmatprep.subr.bf16.mxu0 0
    %1527 = vmatpush2.bf16.msra.mxu0 0
    %1528 = vmatprep.subr.bf16.mxu0 0
    %1529 = vmatpush2.bf16.msra.mxu0 0
    %1530 = vmatprep.subr.bf16.mxu0 0
    %1531 = vmatpush2.bf16.msra.mxu0 0
    %1532 = vmatprep.subr.bf16.mxu0 0
    %1533 = vmatpush2.bf16.msra.mxu0 0
    %1534 = vmatprep.mubr.bf16.mxu0 0
    %1535 = vmatmul.mubr.bf16.gmra.mxu0 %v1500
    %v1536 = vpop.f32.mrf.mxu0
    %v1537 = vadd.f32 0.0, %v1536
    %v1538 = vpop.f32.mrf.mxu0
    %v1539 = vadd.f32 0.0, %v1538
    %v1540 = vpop.f32.mrf.mxu0
    %v1541 = vpop.f32.mrf.mxu0
    %1542 = vdwg.mxu0
    %v1543 = vadd.f32 %v1472, %v1537
    %v1544 = vadd.f32 %v1473, %v1539
    %v1545 = vld [vmem:[%s3 + $0x1a0] sm:$0xff]
    %v1546 = vld [vmem:[%s3 + $0x1a8] sm:$0xff]
    %v1547 = vld [vmem:[%s3 + $0x1b0] sm:$0xff]
    %v1548 = vld [vmem:[%s3 + $0x1b8] sm:$0xff]
    %v1550 = vrot.slane %v1474, 1
    %v1555 = vunpack.c.l.b16 %v1545
    %v1556 = vunpack.c.h.b16 %v1545
    %v1557 = vunpack.c.l.b16 %v1546
    %v1558 = vunpack.c.h.b16 %v1546
    %v1559 = vunpack.c.l.b16 %v1547
    %v1560 = vunpack.c.h.b16 %v1547
    %v1561 = vunpack.c.l.b16 %v1548
    %v1562 = vunpack.c.h.b16 %v1548
    %v1563 = vpack.c.b16 %v1557, %v1555
    %v1564 = vpack.c.b16 %v1558, %v1556
    %v1565 = vpack.c.b16 %v1561, %v1559
    %v1566 = vpack.c.b16 %v1562, %v1560
    %v1572 = vsel %vm653, %v1550, 0
    %1574 = vmatprep.subr.bf16.mxu0 0
    %1575 = vmatpush1.bf16.msra.mxu0 0
    %1576 = vmatprep.subr.bf16.mxu0 0
    %1577 = vmatpush1.bf16.msra.mxu0 0
    %1578 = vmatprep.subr.bf16.mxu0 0
    %1579 = vmatpush1.bf16.msra.mxu0 0
    %1580 = vmatprep.subr.bf16.mxu0 0
    %1581 = vmatpush1.bf16.msra.mxu0 0
    %1582 = vmatprep.subr.bf16.mxu0 0
    %1583 = vmatpush1.bf16.msra.mxu0 0
    %1584 = vmatprep.subr.bf16.mxu0 0
    %1585 = vmatpush1.bf16.msra.mxu0 0
    %1586 = vmatprep.subr.bf16.mxu0 %v1566
    %1587 = vmatpush1.bf16.msra.mxu0 %v1565
    %1588 = vmatprep.subr.bf16.mxu0 %v1564
    %1589 = vmatpush1.bf16.msra.mxu0 %v1563
    %1590 = vmatprep.subr.bf16.mxu0 0
    %1591 = vmatpush2.bf16.msra.mxu0 0
    %1592 = vmatprep.subr.bf16.mxu0 0
    %1593 = vmatpush2.bf16.msra.mxu0 0
    %1594 = vmatprep.subr.bf16.mxu0 0
    %1595 = vmatpush2.bf16.msra.mxu0 0
    %1596 = vmatprep.subr.bf16.mxu0 0
    %1597 = vmatpush2.bf16.msra.mxu0 0
    %1598 = vmatprep.subr.bf16.mxu0 0
    %1599 = vmatpush2.bf16.msra.mxu0 0
    %1600 = vmatprep.subr.bf16.mxu0 0
    %1601 = vmatpush2.bf16.msra.mxu0 0
    %1602 = vmatprep.subr.bf16.mxu0 0
    %1603 = vmatpush2.bf16.msra.mxu0 0
    %1604 = vmatprep.subr.bf16.mxu0 0
    %1605 = vmatpush2.bf16.msra.mxu0 0
    %1606 = vmatprep.mubr.bf16.mxu0 0
    %1607 = vmatmul.mubr.bf16.gmra.mxu0 %v1572
    %v1608 = vpop.f32.mrf.mxu0
    %v1609 = vadd.f32 0.0, %v1608
    %v1610 = vpop.f32.mrf.mxu0
    %v1611 = vadd.f32 0.0, %v1610
    %v1612 = vpop.f32.mrf.mxu0
    %v1613 = vpop.f32.mrf.mxu0
    %1614 = vdwg.mxu0
    %v1615 = vadd.f32 %v1543, %v1609
    %v1616 = vadd.f32 %v1544, %v1611
    %v1617 = vld [vmem:[%s3 + $0x1c0] sm:$0xff]
    %v1618 = vld [vmem:[%s3 + $0x1c8] sm:$0xff]
    %v1619 = vld [vmem:[%s3 + $0x1d0] sm:$0xff]
    %v1620 = vld [vmem:[%s3 + $0x1d8] sm:$0xff]
    %v1621 = vrot.slane %v1474, 2
    %v1626 = vunpack.c.l.b16 %v1617
    %v1627 = vunpack.c.h.b16 %v1617
    %v1628 = vunpack.c.l.b16 %v1618
    %v1629 = vunpack.c.h.b16 %v1618
    %v1630 = vunpack.c.l.b16 %v1619
    %v1631 = vunpack.c.h.b16 %v1619
    %v1632 = vunpack.c.l.b16 %v1620
    %v1633 = vunpack.c.h.b16 %v1620
    %v1634 = vpack.c.b16 %v1628, %v1626
    %v1635 = vpack.c.b16 %v1629, %v1627
    %v1636 = vpack.c.b16 %v1632, %v1630
    %v1637 = vpack.c.b16 %v1633, %v1631
    %v1643 = vsel %vm653, %v1621, 0
    %1645 = vmatprep.subr.bf16.mxu0 0
    %1646 = vmatpush1.bf16.msra.mxu0 0
    %1647 = vmatprep.subr.bf16.mxu0 0
    %1648 = vmatpush1.bf16.msra.mxu0 0
    %1649 = vmatprep.subr.bf16.mxu0 0
    %1650 = vmatpush1.bf16.msra.mxu0 0
    %1651 = vmatprep.subr.bf16.mxu0 0
    %1652 = vmatpush1.bf16.msra.mxu0 0
    %1653 = vmatprep.subr.bf16.mxu0 0
    %1654 = vmatpush1.bf16.msra.mxu0 0
    %1655 = vmatprep.subr.bf16.mxu0 0
    %1656 = vmatpush1.bf16.msra.mxu0 0
    %1657 = vmatprep.subr.bf16.mxu0 %v1637
    %1658 = vmatpush1.bf16.msra.mxu0 %v1636
    %1659 = vmatprep.subr.bf16.mxu0 %v1635
    %1660 = vmatpush1.bf16.msra.mxu0 %v1634
    %1661 = vmatprep.subr.bf16.mxu0 0
    %1662 = vmatpush2.bf16.msra.mxu0 0
    %1663 = vmatprep.subr.bf16.mxu0 0
    %1664 = vmatpush2.bf16.msra.mxu0 0
    %1665 = vmatprep.subr.bf16.mxu0 0
    %1666 = vmatpush2.bf16.msra.mxu0 0
    %1667 = vmatprep.subr.bf16.mxu0 0
    %1668 = vmatpush2.bf16.msra.mxu0 0
    %1669 = vmatprep.subr.bf16.mxu0 0
    %1670 = vmatpush2.bf16.msra.mxu0 0
    %1671 = vmatprep.subr.bf16.mxu0 0
    %1672 = vmatpush2.bf16.msra.mxu0 0
    %1673 = vmatprep.subr.bf16.mxu0 0
    %1674 = vmatpush2.bf16.msra.mxu0 0
    %1675 = vmatprep.subr.bf16.mxu0 0
    %1676 = vmatpush2.bf16.msra.mxu0 0
    %1677 = vmatprep.mubr.bf16.mxu0 0
    %1678 = vmatmul.mubr.bf16.gmra.mxu0 %v1643
    %v1679 = vpop.f32.mrf.mxu0
    %v1680 = vadd.f32 0.0, %v1679
    %v1681 = vpop.f32.mrf.mxu0
    %v1682 = vadd.f32 0.0, %v1681
    %v1683 = vpop.f32.mrf.mxu0
    %v1684 = vpop.f32.mrf.mxu0
    %1685 = vdwg.mxu0
    %v1686 = vadd.f32 %v1615, %v1680
    %v1687 = vadd.f32 %v1616, %v1682
    %v1688 = vld [vmem:[%s3 + $0x1e0] sm:$0xff]
    %v1689 = vld [vmem:[%s3 + $0x1e8] sm:$0xff]
    %v1690 = vld [vmem:[%s3 + $0x1f0] sm:$0xff]
    %v1691 = vld [vmem:[%s3 + $0x1f8] sm:$0xff]
    %v1692 = vrot.slane %v1474, 3
    %v1697 = vunpack.c.l.b16 %v1688
    %v1698 = vunpack.c.h.b16 %v1688
    %v1699 = vunpack.c.l.b16 %v1689
    %v1700 = vunpack.c.h.b16 %v1689
    %v1701 = vunpack.c.l.b16 %v1690
    %v1702 = vunpack.c.h.b16 %v1690
    %v1703 = vunpack.c.l.b16 %v1691
    %v1704 = vunpack.c.h.b16 %v1691
    %v1705 = vpack.c.b16 %v1699, %v1697
    %v1706 = vpack.c.b16 %v1700, %v1698
    %v1707 = vpack.c.b16 %v1703, %v1701
    %v1708 = vpack.c.b16 %v1704, %v1702
    %v1714 = vsel %vm653, %v1692, 0
    %1716 = vmatprep.subr.bf16.mxu0 0
    %1717 = vmatpush1.bf16.msra.mxu0 0
    %1718 = vmatprep.subr.bf16.mxu0 0
    %1719 = vmatpush1.bf16.msra.mxu0 0
    %1720 = vmatprep.subr.bf16.mxu0 0
    %1721 = vmatpush1.bf16.msra.mxu0 0
    %1722 = vmatprep.subr.bf16.mxu0 0
    %1723 = vmatpush1.bf16.msra.mxu0 0
    %1724 = vmatprep.subr.bf16.mxu0 0
    %1725 = vmatpush1.bf16.msra.mxu0 0
    %1726 = vmatprep.subr.bf16.mxu0 0
    %1727 = vmatpush1.bf16.msra.mxu0 0
    %1728 = vmatprep.subr.bf16.mxu0 %v1708
    %1729 = vmatpush1.bf16.msra.mxu0 %v1707
    %1730 = vmatprep.subr.bf16.mxu0 %v1706
    %1731 = vmatpush1.bf16.msra.mxu0 %v1705
    %1732 = vmatprep.subr.bf16.mxu0 0
    %1733 = vmatpush2.bf16.msra.mxu0 0
    %1734 = vmatprep.subr.bf16.mxu0 0
    %1735 = vmatpush2.bf16.msra.mxu0 0
    %1736 = vmatprep.subr.bf16.mxu0 0
    %1737 = vmatpush2.bf16.msra.mxu0 0
    %1738 = vmatprep.subr.bf16.mxu0 0
    %1739 = vmatpush2.bf16.msra.mxu0 0
    %1740 = vmatprep.subr.bf16.mxu0 0
    %1741 = vmatpush2.bf16.msra.mxu0 0
    %1742 = vmatprep.subr.bf16.mxu0 0
    %1743 = vmatpush2.bf16.msra.mxu0 0
    %1744 = vmatprep.subr.bf16.mxu0 0
    %1745 = vmatpush2.bf16.msra.mxu0 0
    %1746 = vmatprep.subr.bf16.mxu0 0
    %1747 = vmatpush2.bf16.msra.mxu0 0
    %1748 = vmatprep.mubr.bf16.mxu0 0
    %1749 = vmatmul.mubr.bf16.gmra.mxu0 %v1714
    %v1750 = vpop.f32.mrf.mxu0
    %v1751 = vadd.f32 0.0, %v1750
    %v1752 = vpop.f32.mrf.mxu0
    %v1753 = vadd.f32 0.0, %v1752
    %v1754 = vpop.f32.mrf.mxu0
    %v1755 = vpop.f32.mrf.mxu0
    %1756 = vdwg.mxu0
    %v1757 = vadd.f32 %v1686, %v1751
    %v1758 = vadd.f32 %v1687, %v1753
    %v1759 = vpack.c.bf16 %v621, %v621
    %v1760 = vld [vmem:[%s3 + $0x200] sm:$0xff]
    %v1761 = vld [vmem:[%s3 + $0x208] sm:$0xff]
    %v1762 = vld [vmem:[%s3 + $0x210] sm:$0xff]
    %v1763 = vld [vmem:[%s3 + $0x218] sm:$0xff]
    %v1768 = vunpack.c.l.b16 %v1760
    %v1769 = vunpack.c.h.b16 %v1760
    %v1770 = vunpack.c.l.b16 %v1761
    %v1771 = vunpack.c.h.b16 %v1761
    %v1772 = vunpack.c.l.b16 %v1762
    %v1773 = vunpack.c.h.b16 %v1762
    %v1774 = vunpack.c.l.b16 %v1763
    %v1775 = vunpack.c.h.b16 %v1763
    %v1776 = vpack.c.b16 %v1770, %v1768
    %v1777 = vpack.c.b16 %v1771, %v1769
    %v1778 = vpack.c.b16 %v1774, %v1772
    %v1779 = vpack.c.b16 %v1775, %v1773
    %v1785 = vsel %vm653, %v1759, 0
    %1787 = vmatprep.subr.bf16.mxu0 0
    %1788 = vmatpush1.bf16.msra.mxu0 0
    %1789 = vmatprep.subr.bf16.mxu0 0
    %1790 = vmatpush1.bf16.msra.mxu0 0
    %1791 = vmatprep.subr.bf16.mxu0 0
    %1792 = vmatpush1.bf16.msra.mxu0 0
    %1793 = vmatprep.subr.bf16.mxu0 0
    %1794 = vmatpush1.bf16.msra.mxu0 0
    %1795 = vmatprep.subr.bf16.mxu0 0
    %1796 = vmatpush1.bf16.msra.mxu0 0
    %1797 = vmatprep.subr.bf16.mxu0 0
    %1798 = vmatpush1.bf16.msra.mxu0 0
    %1799 = vmatprep.subr.bf16.mxu0 %v1779
    %1800 = vmatpush1.bf16.msra.mxu0 %v1778
    %1801 = vmatprep.subr.bf16.mxu0 %v1777
    %1802 = vmatpush1.bf16.msra.mxu0 %v1776
    %1803 = vmatprep.subr.bf16.mxu0 0
    %1804 = vmatpush2.bf16.msra.mxu0 0
    %1805 = vmatprep.subr.bf16.mxu0 0
    %1806 = vmatpush2.bf16.msra.mxu0 0
    %1807 = vmatprep.subr.bf16.mxu0 0
    %1808 = vmatpush2.bf16.msra.mxu0 0
    %1809 = vmatprep.subr.bf16.mxu0 0
    %1810 = vmatpush2.bf16.msra.mxu0 0
    %1811 = vmatprep.subr.bf16.mxu0 0
    %1812 = vmatpush2.bf16.msra.mxu0 0
    %1813 = vmatprep.subr.bf16.mxu0 0
    %1814 = vmatpush2.bf16.msra.mxu0 0
    %1815 = vmatprep.subr.bf16.mxu0 0
    %1816 = vmatpush2.bf16.msra.mxu0 0
    %1817 = vmatprep.subr.bf16.mxu0 0
    %1818 = vmatpush2.bf16.msra.mxu0 0
    %1819 = vmatprep.mubr.bf16.mxu0 0
    %1820 = vmatmul.mubr.bf16.gmra.mxu0 %v1785
    %v1821 = vpop.f32.mrf.mxu0
    %v1822 = vadd.f32 0.0, %v1821
    %v1823 = vpop.f32.mrf.mxu0
    %v1824 = vadd.f32 0.0, %v1823
    %v1825 = vpop.f32.mrf.mxu0
    %v1826 = vpop.f32.mrf.mxu0
    %1827 = vdwg.mxu0
    %v1828 = vadd.f32 %v1757, %v1822
    %v1829 = vadd.f32 %v1758, %v1824
    %v1830 = vld [vmem:[%s4] sm:$0x3]
    %v1832 = vlaneseq
    %v1833 = vshrl.u32 %v1832, 7
    %v1834 = vsub.s32 0, %v1833
    %v1835 = vrot.slane %v1830, %v1834
    %v1836 = vlaneseq
    %v1837 = vshrl.u32 %v1836, 7
    %v1838 = vsub.s32 1, %v1837
    %v1839 = vrot.slane %v1830, %v1838
    %v1842 = vadd.f32 %v1828, %v1835
    %v1843 = vadd.f32 %v1829, %v1839
    %v1844 = vmax.f32 %v1842, 0.0
    %v1845 = vmax.f32 %v1843, 0.0
    %v1846 = vpack.c.bf16 %v1844, %v1844
    %v1847 = vpack.c.bf16 %v1845, %v1845
    %v1848 = vld [vmem:[%s5] sm:$0xff]
    %v1849 = vld [vmem:[%s5 + $0x8] sm:$0xff]
    %v1850 = vld [vmem:[%s5 + $0x10] sm:$0xff]
    %v1851 = vld [vmem:[%s5 + $0x18] sm:$0xff]
    %v1852 = vld [vmem:[%s5 + $0x20] sm:$0xff]
    %v1853 = vld [vmem:[%s5 + $0x28] sm:$0xff]
    %v1854 = vld [vmem:[%s5 + $0x30] sm:$0xff]
    %v1855 = vld [vmem:[%s5 + $0x38] sm:$0xff]
    %v1856 = vld [vmem:[%s5 + $0x40] sm:$0xff]
    %v1857 = vld [vmem:[%s5 + $0x48] sm:$0xff]
    %v1858 = vld [vmem:[%s5 + $0x50] sm:$0xff]
    %v1859 = vld [vmem:[%s5 + $0x58] sm:$0xff]
    %v1860 = vld [vmem:[%s5 + $0x60] sm:$0xff]
    %v1861 = vld [vmem:[%s5 + $0x68] sm:$0xff]
    %v1862 = vld [vmem:[%s5 + $0x70] sm:$0xff]
    %v1863 = vld [vmem:[%s5 + $0x78] sm:$0xff]
    %v1864 = vld [vmem:[%s5 + $0x80] sm:$0xff]
    %v1865 = vld [vmem:[%s5 + $0x88] sm:$0xff]
    %v1866 = vld [vmem:[%s5 + $0x90] sm:$0xff]
    %v1867 = vld [vmem:[%s5 + $0x98] sm:$0xff]
    %v1868 = vld [vmem:[%s5 + $0xa0] sm:$0xff]
    %v1869 = vld [vmem:[%s5 + $0xa8] sm:$0xff]
    %v1870 = vld [vmem:[%s5 + $0xb0] sm:$0xff]
    %v1871 = vld [vmem:[%s5 + $0xb8] sm:$0xff]
    %v1872 = vld [vmem:[%s5 + $0xc0] sm:$0xff]
    %v1873 = vld [vmem:[%s5 + $0xc8] sm:$0xff]
    %v1874 = vld [vmem:[%s5 + $0xd0] sm:$0xff]
    %v1875 = vld [vmem:[%s5 + $0xd8] sm:$0xff]
    %v1876 = vld [vmem:[%s5 + $0xe0] sm:$0xff]
    %v1877 = vld [vmem:[%s5 + $0xe8] sm:$0xff]
    %v1878 = vld [vmem:[%s5 + $0xf0] sm:$0xff]
    %v1879 = vld [vmem:[%s5 + $0xf8] sm:$0xff]
    %v1880 = vld [vmem:[%s6] sm:$0x3]
    %v1882 = vlaneseq
    %v1883 = vshrl.u32 %v1882, 7
    %v1884 = vsub.s32 0, %v1883
    %v1885 = vrot.slane %v1880, %v1884
    %v1886 = vlaneseq
    %v1887 = vshrl.u32 %v1886, 7
    %v1888 = vsub.s32 1, %v1887
    %v1889 = vrot.slane %v1880, %v1888
    %v1924 = vunpack.c.l.b16 %v1848
    %v1925 = vunpack.c.h.b16 %v1848
    %v1926 = vunpack.c.l.b16 %v1849
    %v1927 = vunpack.c.h.b16 %v1849
    %v1928 = vunpack.c.l.b16 %v1850
    %v1929 = vunpack.c.h.b16 %v1850
    %v1930 = vunpack.c.l.b16 %v1851
    %v1931 = vunpack.c.h.b16 %v1851
    %v1932 = vunpack.c.l.b16 %v1852
    %v1933 = vunpack.c.h.b16 %v1852
    %v1934 = vunpack.c.l.b16 %v1853
    %v1935 = vunpack.c.h.b16 %v1853
    %v1936 = vunpack.c.l.b16 %v1854
    %v1937 = vunpack.c.h.b16 %v1854
    %v1938 = vunpack.c.l.b16 %v1855
    %v1939 = vunpack.c.h.b16 %v1855
    %v1940 = vunpack.c.l.b16 %v1856
    %v1941 = vunpack.c.h.b16 %v1856
    %v1942 = vunpack.c.l.b16 %v1857
    %v1943 = vunpack.c.h.b16 %v1857
    %v1944 = vunpack.c.l.b16 %v1858
    %v1945 = vunpack.c.h.b16 %v1858
    %v1946 = vunpack.c.l.b16 %v1859
    %v1947 = vunpack.c.h.b16 %v1859
    %v1948 = vunpack.c.l.b16 %v1860
    %v1949 = vunpack.c.h.b16 %v1860
    %v1950 = vunpack.c.l.b16 %v1861
    %v1951 = vunpack.c.h.b16 %v1861
    %v1952 = vunpack.c.l.b16 %v1862
    %v1953 = vunpack.c.h.b16 %v1862
    %v1954 = vunpack.c.l.b16 %v1863
    %v1955 = vunpack.c.h.b16 %v1863
    %v1956 = vunpack.c.l.b16 %v1864
    %v1957 = vunpack.c.h.b16 %v1864
    %v1958 = vunpack.c.l.b16 %v1865
    %v1959 = vunpack.c.h.b16 %v1865
    %v1960 = vunpack.c.l.b16 %v1866
    %v1961 = vunpack.c.h.b16 %v1866
    %v1962 = vunpack.c.l.b16 %v1867
    %v1963 = vunpack.c.h.b16 %v1867
    %v1964 = vunpack.c.l.b16 %v1868
    %v1965 = vunpack.c.h.b16 %v1868
    %v1966 = vunpack.c.l.b16 %v1869
    %v1967 = vunpack.c.h.b16 %v1869
    %v1968 = vunpack.c.l.b16 %v1870
    %v1969 = vunpack.c.h.b16 %v1870
    %v1970 = vunpack.c.l.b16 %v1871
    %v1971 = vunpack.c.h.b16 %v1871
    %v1972 = vunpack.c.l.b16 %v1872
    %v1973 = vunpack.c.h.b16 %v1872
    %v1974 = vunpack.c.l.b16 %v1873
    %v1975 = vunpack.c.h.b16 %v1873
    %v1976 = vunpack.c.l.b16 %v1874
    %v1977 = vunpack.c.h.b16 %v1874
    %v1978 = vunpack.c.l.b16 %v1875
    %v1979 = vunpack.c.h.b16 %v1875
    %v1980 = vunpack.c.l.b16 %v1876
    %v1981 = vunpack.c.h.b16 %v1876
    %v1982 = vunpack.c.l.b16 %v1877
    %v1983 = vunpack.c.h.b16 %v1877
    %v1984 = vunpack.c.l.b16 %v1878
    %v1985 = vunpack.c.h.b16 %v1878
    %v1986 = vunpack.c.l.b16 %v1879
    %v1987 = vunpack.c.h.b16 %v1879
    %v1988 = vpack.c.b16 %v1926, %v1924
    %v1989 = vpack.c.b16 %v1927, %v1925
    %v1990 = vpack.c.b16 %v1930, %v1928
    %v1991 = vpack.c.b16 %v1931, %v1929
    %v1992 = vpack.c.b16 %v1934, %v1932
    %v1993 = vpack.c.b16 %v1935, %v1933
    %v1994 = vpack.c.b16 %v1938, %v1936
    %v1995 = vpack.c.b16 %v1939, %v1937
    %v1996 = vpack.c.b16 %v1942, %v1940
    %v1997 = vpack.c.b16 %v1943, %v1941
    %v1998 = vpack.c.b16 %v1946, %v1944
    %v1999 = vpack.c.b16 %v1947, %v1945
    %v2000 = vpack.c.b16 %v1950, %v1948
    %v2001 = vpack.c.b16 %v1951, %v1949
    %v2002 = vpack.c.b16 %v1954, %v1952
    %v2003 = vpack.c.b16 %v1955, %v1953
    %v2004 = vpack.c.b16 %v1958, %v1956
    %v2005 = vpack.c.b16 %v1959, %v1957
    %v2006 = vpack.c.b16 %v1962, %v1960
    %v2007 = vpack.c.b16 %v1963, %v1961
    %v2008 = vpack.c.b16 %v1966, %v1964
    %v2009 = vpack.c.b16 %v1967, %v1965
    %v2010 = vpack.c.b16 %v1970, %v1968
    %v2011 = vpack.c.b16 %v1971, %v1969
    %v2012 = vpack.c.b16 %v1974, %v1972
    %v2013 = vpack.c.b16 %v1975, %v1973
    %v2014 = vpack.c.b16 %v1978, %v1976
    %v2015 = vpack.c.b16 %v1979, %v1977
    %v2016 = vpack.c.b16 %v1982, %v1980
    %v2017 = vpack.c.b16 %v1983, %v1981
    %v2018 = vpack.c.b16 %v1986, %v1984
    %v2019 = vpack.c.b16 %v1987, %v1985
    %2052 = vmatprep.subr.bf16.mxu0 %v2003
    %2053 = vmatpush1.bf16.msra.mxu0 %v2002
    %2054 = vmatprep.subr.bf16.mxu0 %v2001
    %2055 = vmatpush1.bf16.msra.mxu0 %v2000
    %2056 = vmatprep.subr.bf16.mxu0 %v1999
    %2057 = vmatpush1.bf16.msra.mxu0 %v1998
    %2058 = vmatprep.subr.bf16.mxu0 %v1997
    %2059 = vmatpush1.bf16.msra.mxu0 %v1996
    %2060 = vmatprep.subr.bf16.mxu0 %v1995
    %2061 = vmatpush1.bf16.msra.mxu0 %v1994
    %2062 = vmatprep.subr.bf16.mxu0 %v1993
    %2063 = vmatpush1.bf16.msra.mxu0 %v1992
    %2064 = vmatprep.subr.bf16.mxu0 %v1991
    %2065 = vmatpush1.bf16.msra.mxu0 %v1990
    %2066 = vmatprep.subr.bf16.mxu0 %v1989
    %2067 = vmatpush1.bf16.msra.mxu0 %v1988
    %2068 = vmatprep.subr.bf16.mxu0 %v2019
    %2069 = vmatpush2.bf16.msra.mxu0 %v2018
    %2070 = vmatprep.subr.bf16.mxu0 %v2017
    %2071 = vmatpush2.bf16.msra.mxu0 %v2016
    %2072 = vmatprep.subr.bf16.mxu0 %v2015
    %2073 = vmatpush2.bf16.msra.mxu0 %v2014
    %2074 = vmatprep.subr.bf16.mxu0 %v2013
    %2075 = vmatpush2.bf16.msra.mxu0 %v2012
    %2076 = vmatprep.subr.bf16.mxu0 %v2011
    %2077 = vmatpush2.bf16.msra.mxu0 %v2010
    %2078 = vmatprep.subr.bf16.mxu0 %v2009
    %2079 = vmatpush2.bf16.msra.mxu0 %v2008
    %2080 = vmatprep.subr.bf16.mxu0 %v2007
    %2081 = vmatpush2.bf16.msra.mxu0 %v2006
    %2082 = vmatprep.subr.bf16.mxu0 %v2005
    %2083 = vmatpush2.bf16.msra.mxu0 %v2004
    %2084 = vmatprep.mubr.bf16.mxu0 %v1847
    %2085 = vmatmul.mubr.bf16.gmra.mxu0 %v1846
    %v2086 = vpop.f32.mrf.mxu0
    %v2087 = vadd.f32 %v1885, %v2086
    %v2088 = vpop.f32.mrf.mxu0
    %v2089 = vadd.f32 %v1889, %v2088
    %v2090 = vpop.f32.mrf.mxu0
    %v2091 = vpop.f32.mrf.mxu0
    %2092 = vdwg.mxu0
    %v2093 = vmax.f32 %v2087, 0.0
    %v2094 = vmax.f32 %v2089, 0.0
    %v2095 = vpack.c.bf16 %v2093, %v2093
    %v2096 = vpack.c.bf16 %v2094, %v2094
    %v2097 = vld [vmem:[%s7] sm:$0xff]
    %v2098 = vld [vmem:[%s7 + $0x8] sm:$0xff]
    %v2099 = vld [vmem:[%s7 + $0x10] sm:$0xff]
    %v2100 = vld [vmem:[%s7 + $0x18] sm:$0xff]
    %v2101 = vld [vmem:[%s7 + $0x20] sm:$0xff]
    %v2102 = vld [vmem:[%s7 + $0x28] sm:$0xff]
    %v2103 = vld [vmem:[%s7 + $0x30] sm:$0xff]
    %v2104 = vld [vmem:[%s7 + $0x38] sm:$0xff]
    %v2105 = vld [vmem:[%s7 + $0x40] sm:$0xff]
    %v2106 = vld [vmem:[%s7 + $0x48] sm:$0xff]
    %v2107 = vld [vmem:[%s7 + $0x50] sm:$0xff]
    %v2108 = vld [vmem:[%s7 + $0x58] sm:$0xff]
    %v2109 = vld [vmem:[%s7 + $0x60] sm:$0xff]
    %v2110 = vld [vmem:[%s7 + $0x68] sm:$0xff]
    %v2111 = vld [vmem:[%s7 + $0x70] sm:$0xff]
    %v2112 = vld [vmem:[%s7 + $0x78] sm:$0xff]
    %v2113 = vld [vmem:[%s7 + $0x80] sm:$0xff]
    %v2114 = vld [vmem:[%s7 + $0x88] sm:$0xff]
    %v2115 = vld [vmem:[%s7 + $0x90] sm:$0xff]
    %v2116 = vld [vmem:[%s7 + $0x98] sm:$0xff]
    %v2117 = vld [vmem:[%s7 + $0xa0] sm:$0xff]
    %v2118 = vld [vmem:[%s7 + $0xa8] sm:$0xff]
    %v2119 = vld [vmem:[%s7 + $0xb0] sm:$0xff]
    %v2120 = vld [vmem:[%s7 + $0xb8] sm:$0xff]
    %v2121 = vld [vmem:[%s7 + $0xc0] sm:$0xff]
    %v2122 = vld [vmem:[%s7 + $0xc8] sm:$0xff]
    %v2123 = vld [vmem:[%s7 + $0xd0] sm:$0xff]
    %v2124 = vld [vmem:[%s7 + $0xd8] sm:$0xff]
    %v2125 = vld [vmem:[%s7 + $0xe0] sm:$0xff]
    %v2126 = vld [vmem:[%s7 + $0xe8] sm:$0xff]
    %v2127 = vld [vmem:[%s7 + $0xf0] sm:$0xff]
    %v2128 = vld [vmem:[%s7 + $0xf8] sm:$0xff]
    %v2129 = vld [vmem:[%s8] sm:$0x3]
    %v2131 = vlaneseq
    %v2132 = vshrl.u32 %v2131, 7
    %v2133 = vsub.s32 0, %v2132
    %v2134 = vrot.slane %v2129, %v2133
    %v2135 = vlaneseq
    %v2136 = vshrl.u32 %v2135, 7
    %v2137 = vsub.s32 1, %v2136
    %v2138 = vrot.slane %v2129, %v2137
    %v2173 = vunpack.c.l.b16 %v2097
    %v2174 = vunpack.c.h.b16 %v2097
    %v2175 = vunpack.c.l.b16 %v2098
    %v2176 = vunpack.c.h.b16 %v2098
    %v2177 = vunpack.c.l.b16 %v2099
    %v2178 = vunpack.c.h.b16 %v2099
    %v2179 = vunpack.c.l.b16 %v2100
    %v2180 = vunpack.c.h.b16 %v2100
    %v2181 = vunpack.c.l.b16 %v2101
    %v2182 = vunpack.c.h.b16 %v2101
    %v2183 = vunpack.c.l.b16 %v2102
    %v2184 = vunpack.c.h.b16 %v2102
    %v2185 = vunpack.c.l.b16 %v2103
    %v2186 = vunpack.c.h.b16 %v2103
    %v2187 = vunpack.c.l.b16 %v2104
    %v2188 = vunpack.c.h.b16 %v2104
    %v2189 = vunpack.c.l.b16 %v2105
    %v2190 = vunpack.c.h.b16 %v2105
    %v2191 = vunpack.c.l.b16 %v2106
    %v2192 = vunpack.c.h.b16 %v2106
    %v2193 = vunpack.c.l.b16 %v2107
    %v2194 = vunpack.c.h.b16 %v2107
    %v2195 = vunpack.c.l.b16 %v2108
    %v2196 = vunpack.c.h.b16 %v2108
    %v2197 = vunpack.c.l.b16 %v2109
    %v2198 = vunpack.c.h.b16 %v2109
    %v2199 = vunpack.c.l.b16 %v2110
    %v2200 = vunpack.c.h.b16 %v2110
    %v2201 = vunpack.c.l.b16 %v2111
    %v2202 = vunpack.c.h.b16 %v2111
    %v2203 = vunpack.c.l.b16 %v2112
    %v2204 = vunpack.c.h.b16 %v2112
    %v2205 = vunpack.c.l.b16 %v2113
    %v2206 = vunpack.c.h.b16 %v2113
    %v2207 = vunpack.c.l.b16 %v2114
    %v2208 = vunpack.c.h.b16 %v2114
    %v2209 = vunpack.c.l.b16 %v2115
    %v2210 = vunpack.c.h.b16 %v2115
    %v2211 = vunpack.c.l.b16 %v2116
    %v2212 = vunpack.c.h.b16 %v2116
    %v2213 = vunpack.c.l.b16 %v2117
    %v2214 = vunpack.c.h.b16 %v2117
    %v2215 = vunpack.c.l.b16 %v2118
    %v2216 = vunpack.c.h.b16 %v2118
    %v2217 = vunpack.c.l.b16 %v2119
    %v2218 = vunpack.c.h.b16 %v2119
    %v2219 = vunpack.c.l.b16 %v2120
    %v2220 = vunpack.c.h.b16 %v2120
    %v2221 = vunpack.c.l.b16 %v2121
    %v2222 = vunpack.c.h.b16 %v2121
    %v2223 = vunpack.c.l.b16 %v2122
    %v2224 = vunpack.c.h.b16 %v2122
    %v2225 = vunpack.c.l.b16 %v2123
    %v2226 = vunpack.c.h.b16 %v2123
    %v2227 = vunpack.c.l.b16 %v2124
    %v2228 = vunpack.c.h.b16 %v2124
    %v2229 = vunpack.c.l.b16 %v2125
    %v2230 = vunpack.c.h.b16 %v2125
    %v2231 = vunpack.c.l.b16 %v2126
    %v2232 = vunpack.c.h.b16 %v2126
    %v2233 = vunpack.c.l.b16 %v2127
    %v2234 = vunpack.c.h.b16 %v2127
    %v2235 = vunpack.c.l.b16 %v2128
    %v2236 = vunpack.c.h.b16 %v2128
    %v2237 = vpack.c.b16 %v2175, %v2173
    %v2238 = vpack.c.b16 %v2176, %v2174
    %v2239 = vpack.c.b16 %v2179, %v2177
    %v2240 = vpack.c.b16 %v2180, %v2178
    %v2241 = vpack.c.b16 %v2183, %v2181
    %v2242 = vpack.c.b16 %v2184, %v2182
    %v2243 = vpack.c.b16 %v2187, %v2185
    %v2244 = vpack.c.b16 %v2188, %v2186
    %v2245 = vpack.c.b16 %v2191, %v2189
    %v2246 = vpack.c.b16 %v2192, %v2190
    %v2247 = vpack.c.b16 %v2195, %v2193
    %v2248 = vpack.c.b16 %v2196, %v2194
    %v2249 = vpack.c.b16 %v2199, %v2197
    %v2250 = vpack.c.b16 %v2200, %v2198
    %v2251 = vpack.c.b16 %v2203, %v2201
    %v2252 = vpack.c.b16 %v2204, %v2202
    %v2253 = vpack.c.b16 %v2207, %v2205
    %v2254 = vpack.c.b16 %v2208, %v2206
    %v2255 = vpack.c.b16 %v2211, %v2209
    %v2256 = vpack.c.b16 %v2212, %v2210
    %v2257 = vpack.c.b16 %v2215, %v2213
    %v2258 = vpack.c.b16 %v2216, %v2214
    %v2259 = vpack.c.b16 %v2219, %v2217
    %v2260 = vpack.c.b16 %v2220, %v2218
    %v2261 = vpack.c.b16 %v2223, %v2221
    %v2262 = vpack.c.b16 %v2224, %v2222
    %v2263 = vpack.c.b16 %v2227, %v2225
    %v2264 = vpack.c.b16 %v2228, %v2226
    %v2265 = vpack.c.b16 %v2231, %v2229
    %v2266 = vpack.c.b16 %v2232, %v2230
    %v2267 = vpack.c.b16 %v2235, %v2233
    %v2268 = vpack.c.b16 %v2236, %v2234
    %2301 = vmatprep.subr.bf16.mxu0 %v2252
    %2302 = vmatpush1.bf16.msra.mxu0 %v2251
    %2303 = vmatprep.subr.bf16.mxu0 %v2250
    %2304 = vmatpush1.bf16.msra.mxu0 %v2249
    %2305 = vmatprep.subr.bf16.mxu0 %v2248
    %2306 = vmatpush1.bf16.msra.mxu0 %v2247
    %2307 = vmatprep.subr.bf16.mxu0 %v2246
    %2308 = vmatpush1.bf16.msra.mxu0 %v2245
    %2309 = vmatprep.subr.bf16.mxu0 %v2244
    %2310 = vmatpush1.bf16.msra.mxu0 %v2243
    %2311 = vmatprep.subr.bf16.mxu0 %v2242
    %2312 = vmatpush1.bf16.msra.mxu0 %v2241
    %2313 = vmatprep.subr.bf16.mxu0 %v2240
    %2314 = vmatpush1.bf16.msra.mxu0 %v2239
    %2315 = vmatprep.subr.bf16.mxu0 %v2238
    %2316 = vmatpush1.bf16.msra.mxu0 %v2237
    %2317 = vmatprep.subr.bf16.mxu0 %v2268
    %2318 = vmatpush2.bf16.msra.mxu0 %v2267
    %2319 = vmatprep.subr.bf16.mxu0 %v2266
    %2320 = vmatpush2.bf16.msra.mxu0 %v2265
    %2321 = vmatprep.subr.bf16.mxu0 %v2264
    %2322 = vmatpush2.bf16.msra.mxu0 %v2263
    %2323 = vmatprep.subr.bf16.mxu0 %v2262
    %2324 = vmatpush2.bf16.msra.mxu0 %v2261
    %2325 = vmatprep.subr.bf16.mxu0 %v2260
    %2326 = vmatpush2.bf16.msra.mxu0 %v2259
    %2327 = vmatprep.subr.bf16.mxu0 %v2258
    %2328 = vmatpush2.bf16.msra.mxu0 %v2257
    %2329 = vmatprep.subr.bf16.mxu0 %v2256
    %2330 = vmatpush2.bf16.msra.mxu0 %v2255
    %2331 = vmatprep.subr.bf16.mxu0 %v2254
    %2332 = vmatpush2.bf16.msra.mxu0 %v2253
    %2333 = vmatprep.mubr.bf16.mxu0 %v2096
    %2334 = vmatmul.mubr.bf16.gmra.mxu0 %v2095
    %v2335 = vpop.f32.mrf.mxu0
    %v2336 = vadd.f32 %v2134, %v2335
    %v2337 = vpop.f32.mrf.mxu0
    %v2338 = vadd.f32 %v2138, %v2337
    %v2339 = vpop.f32.mrf.mxu0
    %v2340 = vpop.f32.mrf.mxu0
    %2341 = vdwg.mxu0
    %v2342 = vmax.f32 %v2336, 0.0
    %v2343 = vmax.f32 %v2338, 0.0
    %v2344 = vpack.c.bf16 %v2342, %v2342
    %v2345 = vpack.c.bf16 %v2343, %v2343
    %v2346 = vld [vmem:[%s9] sm:$0xff]
    %v2347 = vld [vmem:[%s9 + $0x8] sm:$0xff]
    %v2348 = vld [vmem:[%s9 + $0x10] sm:$0xff]
    %v2349 = vld [vmem:[%s9 + $0x18] sm:$0xff]
    %v2350 = vld [vmem:[%s9 + $0x20] sm:$0xff]
    %v2351 = vld [vmem:[%s9 + $0x28] sm:$0xff]
    %v2352 = vld [vmem:[%s9 + $0x30] sm:$0xff]
    %v2353 = vld [vmem:[%s9 + $0x38] sm:$0xff]
    %v2354 = vld [vmem:[%s9 + $0x40] sm:$0xff]
    %v2355 = vld [vmem:[%s9 + $0x48] sm:$0xff]
    %v2356 = vld [vmem:[%s9 + $0x50] sm:$0xff]
    %v2357 = vld [vmem:[%s9 + $0x58] sm:$0xff]
    %v2358 = vld [vmem:[%s9 + $0x60] sm:$0xff]
    %v2359 = vld [vmem:[%s9 + $0x68] sm:$0xff]
    %v2360 = vld [vmem:[%s9 + $0x70] sm:$0xff]
    %v2361 = vld [vmem:[%s9 + $0x78] sm:$0xff]
    %v2362 = vld [vmem:[%s9 + $0x80] sm:$0xff]
    %v2363 = vld [vmem:[%s9 + $0x88] sm:$0xff]
    %v2364 = vld [vmem:[%s9 + $0x90] sm:$0xff]
    %v2365 = vld [vmem:[%s9 + $0x98] sm:$0xff]
    %v2366 = vld [vmem:[%s9 + $0xa0] sm:$0xff]
    %v2367 = vld [vmem:[%s9 + $0xa8] sm:$0xff]
    %v2368 = vld [vmem:[%s9 + $0xb0] sm:$0xff]
    %v2369 = vld [vmem:[%s9 + $0xb8] sm:$0xff]
    %v2370 = vld [vmem:[%s9 + $0xc0] sm:$0xff]
    %v2371 = vld [vmem:[%s9 + $0xc8] sm:$0xff]
    %v2372 = vld [vmem:[%s9 + $0xd0] sm:$0xff]
    %v2373 = vld [vmem:[%s9 + $0xd8] sm:$0xff]
    %v2374 = vld [vmem:[%s9 + $0xe0] sm:$0xff]
    %v2375 = vld [vmem:[%s9 + $0xe8] sm:$0xff]
    %v2376 = vld [vmem:[%s9 + $0xf0] sm:$0xff]
    %v2377 = vld [vmem:[%s9 + $0xf8] sm:$0xff]
    %v2378 = vld [vmem:[%s10] sm:$0x3]
    %v2380 = vlaneseq
    %v2381 = vshrl.u32 %v2380, 7
    %v2382 = vsub.s32 0, %v2381
    %v2383 = vrot.slane %v2378, %v2382
    %v2384 = vlaneseq
    %v2385 = vshrl.u32 %v2384, 7
    %v2386 = vsub.s32 1, %v2385
    %v2387 = vrot.slane %v2378, %v2386
    %v2422 = vunpack.c.l.b16 %v2346
    %v2423 = vunpack.c.h.b16 %v2346
    %v2424 = vunpack.c.l.b16 %v2347
    %v2425 = vunpack.c.h.b16 %v2347
    %v2426 = vunpack.c.l.b16 %v2348
    %v2427 = vunpack.c.h.b16 %v2348
    %v2428 = vunpack.c.l.b16 %v2349
    %v2429 = vunpack.c.h.b16 %v2349
    %v2430 = vunpack.c.l.b16 %v2350
    %v2431 = vunpack.c.h.b16 %v2350
    %v2432 = vunpack.c.l.b16 %v2351
    %v2433 = vunpack.c.h.b16 %v2351
    %v2434 = vunpack.c.l.b16 %v2352
    %v2435 = vunpack.c.h.b16 %v2352
    %v2436 = vunpack.c.l.b16 %v2353
    %v2437 = vunpack.c.h.b16 %v2353
    %v2438 = vunpack.c.l.b16 %v2354
    %v2439 = vunpack.c.h.b16 %v2354
    %v2440 = vunpack.c.l.b16 %v2355
    %v2441 = vunpack.c.h.b16 %v2355
    %v2442 = vunpack.c.l.b16 %v2356
    %v2443 = vunpack.c.h.b16 %v2356
    %v2444 = vunpack.c.l.b16 %v2357
    %v2445 = vunpack.c.h.b16 %v2357
    %v2446 = vunpack.c.l.b16 %v2358
    %v2447 = vunpack.c.h.b16 %v2358
    %v2448 = vunpack.c.l.b16 %v2359
    %v2449 = vunpack.c.h.b16 %v2359
    %v2450 = vunpack.c.l.b16 %v2360
    %v2451 = vunpack.c.h.b16 %v2360
    %v2452 = vunpack.c.l.b16 %v2361
    %v2453 = vunpack.c.h.b16 %v2361
    %v2454 = vunpack.c.l.b16 %v2362
    %v2455 = vunpack.c.h.b16 %v2362
    %v2456 = vunpack.c.l.b16 %v2363
    %v2457 = vunpack.c.h.b16 %v2363
    %v2458 = vunpack.c.l.b16 %v2364
    %v2459 = vunpack.c.h.b16 %v2364
    %v2460 = vunpack.c.l.b16 %v2365
    %v2461 = vunpack.c.h.b16 %v2365
    %v2462 = vunpack.c.l.b16 %v2366
    %v2463 = vunpack.c.h.b16 %v2366
    %v2464 = vunpack.c.l.b16 %v2367
    %v2465 = vunpack.c.h.b16 %v2367
    %v2466 = vunpack.c.l.b16 %v2368
    %v2467 = vunpack.c.h.b16 %v2368
    %v2468 = vunpack.c.l.b16 %v2369
    %v2469 = vunpack.c.h.b16 %v2369
    %v2470 = vunpack.c.l.b16 %v2370
    %v2471 = vunpack.c.h.b16 %v2370
    %v2472 = vunpack.c.l.b16 %v2371
    %v2473 = vunpack.c.h.b16 %v2371
    %v2474 = vunpack.c.l.b16 %v2372
    %v2475 = vunpack.c.h.b16 %v2372
    %v2476 = vunpack.c.l.b16 %v2373
    %v2477 = vunpack.c.h.b16 %v2373
    %v2478 = vunpack.c.l.b16 %v2374
    %v2479 = vunpack.c.h.b16 %v2374
    %v2480 = vunpack.c.l.b16 %v2375
    %v2481 = vunpack.c.h.b16 %v2375
    %v2482 = vunpack.c.l.b16 %v2376
    %v2483 = vunpack.c.h.b16 %v2376
    %v2484 = vunpack.c.l.b16 %v2377
    %v2485 = vunpack.c.h.b16 %v2377
    %v2486 = vpack.c.b16 %v2424, %v2422
    %v2487 = vpack.c.b16 %v2425, %v2423
    %v2488 = vpack.c.b16 %v2428, %v2426
    %v2489 = vpack.c.b16 %v2429, %v2427
    %v2490 = vpack.c.b16 %v2432, %v2430
    %v2491 = vpack.c.b16 %v2433, %v2431
    %v2492 = vpack.c.b16 %v2436, %v2434
    %v2493 = vpack.c.b16 %v2437, %v2435
    %v2494 = vpack.c.b16 %v2440, %v2438
    %v2495 = vpack.c.b16 %v2441, %v2439
    %v2496 = vpack.c.b16 %v2444, %v2442
    %v2497 = vpack.c.b16 %v2445, %v2443
    %v2498 = vpack.c.b16 %v2448, %v2446
    %v2499 = vpack.c.b16 %v2449, %v2447
    %v2500 = vpack.c.b16 %v2452, %v2450
    %v2501 = vpack.c.b16 %v2453, %v2451
    %v2502 = vpack.c.b16 %v2456, %v2454
    %v2503 = vpack.c.b16 %v2457, %v2455
    %v2504 = vpack.c.b16 %v2460, %v2458
    %v2505 = vpack.c.b16 %v2461, %v2459
    %v2506 = vpack.c.b16 %v2464, %v2462
    %v2507 = vpack.c.b16 %v2465, %v2463
    %v2508 = vpack.c.b16 %v2468, %v2466
    %v2509 = vpack.c.b16 %v2469, %v2467
    %v2510 = vpack.c.b16 %v2472, %v2470
    %v2511 = vpack.c.b16 %v2473, %v2471
    %v2512 = vpack.c.b16 %v2476, %v2474
    %v2513 = vpack.c.b16 %v2477, %v2475
    %v2514 = vpack.c.b16 %v2480, %v2478
    %v2515 = vpack.c.b16 %v2481, %v2479
    %v2516 = vpack.c.b16 %v2484, %v2482
    %v2517 = vpack.c.b16 %v2485, %v2483
    %2550 = vmatprep.subr.bf16.mxu0 %v2501
    %2551 = vmatpush1.bf16.msra.mxu0 %v2500
    %2552 = vmatprep.subr.bf16.mxu0 %v2499
    %2553 = vmatpush1.bf16.msra.mxu0 %v2498
    %2554 = vmatprep.subr.bf16.mxu0 %v2497
    %2555 = vmatpush1.bf16.msra.mxu0 %v2496
    %2556 = vmatprep.subr.bf16.mxu0 %v2495
    %2557 = vmatpush1.bf16.msra.mxu0 %v2494
    %2558 = vmatprep.subr.bf16.mxu0 %v2493
    %2559 = vmatpush1.bf16.msra.mxu0 %v2492
    %2560 = vmatprep.subr.bf16.mxu0 %v2491
    %2561 = vmatpush1.bf16.msra.mxu0 %v2490
    %2562 = vmatprep.subr.bf16.mxu0 %v2489
    %2563 = vmatpush1.bf16.msra.mxu0 %v2488
    %2564 = vmatprep.subr.bf16.mxu0 %v2487
    %2565 = vmatpush1.bf16.msra.mxu0 %v2486
    %2566 = vmatprep.subr.bf16.mxu0 %v2517
    %2567 = vmatpush2.bf16.msra.mxu0 %v2516
    %2568 = vmatprep.subr.bf16.mxu0 %v2515
    %2569 = vmatpush2.bf16.msra.mxu0 %v2514
    %2570 = vmatprep.subr.bf16.mxu0 %v2513
    %2571 = vmatpush2.bf16.msra.mxu0 %v2512
    %2572 = vmatprep.subr.bf16.mxu0 %v2511
    %2573 = vmatpush2.bf16.msra.mxu0 %v2510
    %2574 = vmatprep.subr.bf16.mxu0 %v2509
    %2575 = vmatpush2.bf16.msra.mxu0 %v2508
    %2576 = vmatprep.subr.bf16.mxu0 %v2507
    %2577 = vmatpush2.bf16.msra.mxu0 %v2506
    %2578 = vmatprep.subr.bf16.mxu0 %v2505
    %2579 = vmatpush2.bf16.msra.mxu0 %v2504
    %2580 = vmatprep.subr.bf16.mxu0 %v2503
    %2581 = vmatpush2.bf16.msra.mxu0 %v2502
    %2582 = vmatprep.mubr.bf16.mxu0 %v2345
    %2583 = vmatmul.mubr.bf16.gmra.mxu0 %v2344
    %v2584 = vpop.f32.mrf.mxu0
    %v2585 = vadd.f32 %v2383, %v2584
    %v2586 = vpop.f32.mrf.mxu0
    %v2587 = vadd.f32 %v2387, %v2586
    %v2588 = vpop.f32.mrf.mxu0
    %v2589 = vpop.f32.mrf.mxu0
    %2590 = vdwg.mxu0
    %v2591 = vmax.f32 %v2585, 0.0
    %v2592 = vmax.f32 %v2587, 0.0
    %v2593 = vpack.c.bf16 %v2591, %v2591
    %v2594 = vpack.c.bf16 %v2592, %v2592
    %v2595 = vld [vmem:[%s11] sm:$0xf]
    %v2596 = vld [vmem:[%s11 + $0x4] sm:$0xf]
    %v2597 = vld [vmem:[%s11 + $0x8] sm:$0xf]
    %v2598 = vld [vmem:[%s11 + $0xc] sm:$0xf]
    %v2599 = vld [vmem:[%s11 + $0x10] sm:$0xf]
    %v2600 = vld [vmem:[%s11 + $0x14] sm:$0xf]
    %v2601 = vld [vmem:[%s11 + $0x18] sm:$0xf]
    %v2602 = vld [vmem:[%s11 + $0x1c] sm:$0xf]
    %v2603 = vld [vmem:[%s11 + $0x20] sm:$0xf]
    %v2604 = vld [vmem:[%s11 + $0x24] sm:$0xf]
    %v2605 = vld [vmem:[%s11 + $0x28] sm:$0xf]
    %v2606 = vld [vmem:[%s11 + $0x2c] sm:$0xf]
    %v2607 = vld [vmem:[%s11 + $0x30] sm:$0xf]
    %v2608 = vld [vmem:[%s11 + $0x34] sm:$0xf]
    %v2609 = vld [vmem:[%s11 + $0x38] sm:$0xf]
    %v2610 = vld [vmem:[%s11 + $0x3c] sm:$0xf]
    %v2611 = vld [vmem:[%s11 + $0x40] sm:$0xf]
    %v2612 = vld [vmem:[%s11 + $0x44] sm:$0xf]
    %v2613 = vld [vmem:[%s11 + $0x48] sm:$0xf]
    %v2614 = vld [vmem:[%s11 + $0x4c] sm:$0xf]
    %v2615 = vld [vmem:[%s11 + $0x50] sm:$0xf]
    %v2616 = vld [vmem:[%s11 + $0x54] sm:$0xf]
    %v2617 = vld [vmem:[%s11 + $0x58] sm:$0xf]
    %v2618 = vld [vmem:[%s11 + $0x5c] sm:$0xf]
    %v2619 = vld [vmem:[%s11 + $0x60] sm:$0xf]
    %v2620 = vld [vmem:[%s11 + $0x64] sm:$0xf]
    %v2621 = vld [vmem:[%s11 + $0x68] sm:$0xf]
    %v2622 = vld [vmem:[%s11 + $0x6c] sm:$0xf]
    %v2623 = vld [vmem:[%s11 + $0x70] sm:$0xf]
    %v2624 = vld [vmem:[%s11 + $0x74] sm:$0xf]
    %v2625 = vld [vmem:[%s11 + $0x78] sm:$0xf]
    %v2626 = vld [vmem:[%s11 + $0x7c] sm:$0xf]
    %v2627 = vld [vmem:[%s12] sm:$0x1]
    %v2629 = vlaneseq
    %v2630 = vshrl.u32 %v2629, 7
    %v2631 = vsub.s32 0, %v2630
    %v2632 = vrot.slane %v2627, %v2631
    %v2666 = vunpack.c.l.b16 %v2595
    %v2667 = vunpack.c.l.b16 %v2596
    %v2668 = vunpack.c.l.b16 %v2597
    %v2669 = vunpack.c.l.b16 %v2598
    %v2670 = vunpack.c.l.b16 %v2599
    %v2671 = vunpack.c.l.b16 %v2600
    %v2672 = vunpack.c.l.b16 %v2601
    %v2673 = vunpack.c.l.b16 %v2602
    %v2674 = vunpack.c.l.b16 %v2603
    %v2675 = vunpack.c.l.b16 %v2604
    %v2676 = vunpack.c.l.b16 %v2605
    %v2677 = vunpack.c.l.b16 %v2606
    %v2678 = vunpack.c.l.b16 %v2607
    %v2679 = vunpack.c.l.b16 %v2608
    %v2680 = vunpack.c.l.b16 %v2609
    %v2681 = vunpack.c.l.b16 %v2610
    %v2682 = vunpack.c.l.b16 %v2611
    %v2683 = vunpack.c.l.b16 %v2612
    %v2684 = vunpack.c.l.b16 %v2613
    %v2685 = vunpack.c.l.b16 %v2614
    %v2686 = vunpack.c.l.b16 %v2615
    %v2687 = vunpack.c.l.b16 %v2616
    %v2688 = vunpack.c.l.b16 %v2617
    %v2689 = vunpack.c.l.b16 %v2618
    %v2690 = vunpack.c.l.b16 %v2619
    %v2691 = vunpack.c.l.b16 %v2620
    %v2692 = vunpack.c.l.b16 %v2621
    %v2693 = vunpack.c.l.b16 %v2622
    %v2694 = vunpack.c.l.b16 %v2623
    %v2695 = vunpack.c.l.b16 %v2624
    %v2696 = vunpack.c.l.b16 %v2625
    %v2697 = vunpack.c.l.b16 %v2626
    %v2698 = vpack.c.b16 %v2667, %v2666
    %v2699 = vpack.c.b16 %v2669, %v2668
    %v2700 = vpack.c.b16 %v2671, %v2670
    %v2701 = vpack.c.b16 %v2673, %v2672
    %v2702 = vpack.c.b16 %v2675, %v2674
    %v2703 = vpack.c.b16 %v2677, %v2676
    %v2704 = vpack.c.b16 %v2679, %v2678
    %v2705 = vpack.c.b16 %v2681, %v2680
    %v2706 = vpack.c.b16 %v2683, %v2682
    %v2707 = vpack.c.b16 %v2685, %v2684
    %v2708 = vpack.c.b16 %v2687, %v2686
    %v2709 = vpack.c.b16 %v2689, %v2688
    %v2710 = vpack.c.b16 %v2691, %v2690
    %v2711 = vpack.c.b16 %v2693, %v2692
    %v2712 = vpack.c.b16 %v2695, %v2694
    %v2713 = vpack.c.b16 %v2697, %v2696
    %2730 = vmatprep.subr.bf16.mxu0 0
    %2731 = vmatpush1.bf16.msra.mxu0 %v2705
    %2732 = vmatprep.subr.bf16.mxu0 0
    %2733 = vmatpush1.bf16.msra.mxu0 %v2704
    %2734 = vmatprep.subr.bf16.mxu0 0
    %2735 = vmatpush1.bf16.msra.mxu0 %v2703
    %2736 = vmatprep.subr.bf16.mxu0 0
    %2737 = vmatpush1.bf16.msra.mxu0 %v2702
    %2738 = vmatprep.subr.bf16.mxu0 0
    %2739 = vmatpush1.bf16.msra.mxu0 %v2701
    %2740 = vmatprep.subr.bf16.mxu0 0
    %2741 = vmatpush1.bf16.msra.mxu0 %v2700
    %2742 = vmatprep.subr.bf16.mxu0 0
    %2743 = vmatpush1.bf16.msra.mxu0 %v2699
    %2744 = vmatprep.subr.bf16.mxu0 0
    %2745 = vmatpush1.bf16.msra.mxu0 %v2698
    %2746 = vmatprep.subr.bf16.mxu0 0
    %2747 = vmatpush2.bf16.msra.mxu0 %v2713
    %2748 = vmatprep.subr.bf16.mxu0 0
    %2749 = vmatpush2.bf16.msra.mxu0 %v2712
    %2750 = vmatprep.subr.bf16.mxu0 0
    %2751 = vmatpush2.bf16.msra.mxu0 %v2711
    %2752 = vmatprep.subr.bf16.mxu0 0
    %2753 = vmatpush2.bf16.msra.mxu0 %v2710
    %2754 = vmatprep.subr.bf16.mxu0 0
    %2755 = vmatpush2.bf16.msra.mxu0 %v2709
    %2756 = vmatprep.subr.bf16.mxu0 0
    %2757 = vmatpush2.bf16.msra.mxu0 %v2708
    %2758 = vmatprep.subr.bf16.mxu0 0
    %2759 = vmatpush2.bf16.msra.mxu0 %v2707
    %2760 = vmatprep.subr.bf16.mxu0 0
    %2761 = vmatpush2.bf16.msra.mxu0 %v2706
    %2762 = vmatprep.mubr.bf16.mxu0 %v2594
    %2763 = vmatmul.mubr.bf16.gmra.mxu0 %v2593
    %v2764 = vpop.f32.mrf.mxu0
    %v2765 = vadd.f32 %v2632, %v2764
    %v2766 = vpop.f32.mrf.mxu0
    %v2767 = vpop.f32.mrf.mxu0
    %v2768 = vpop.f32.mrf.mxu0
    %2769 = vdwg.mxu0
    %vm2770 = vcmask 33792
    %2771 = vst.msk [vmem:[#allocation2] sm:$0x3] %vm2770, %v2765
    // Predicated region
    $region54: #{dqn_forward.1} parent=1 // pred_check
      _
    $region55: #{dqn_forward.1} parent=1 // pred_check_branch
      %2773 = sbr.rel (0) target = $region57
    $region56: #{dqn_forward.1} parent=1 // pred_region
      %s2775 = ssub.s32 32, 32
      %2776 = vsyncadd [#allocation3], %s2775
      %s2778 = sshll.u32 [#allocation2], 4
      %s2779 = int_to_ptr.vmem [resolvable:$true] %s2778
      %2781 = dma.vmem_to_hbm [thread:$0]  %s2779, 32, %s13, [#allocation3]
    $region57: #{dqn_forward.1} parent=1 // pred_fallthru
      _
    // Predicated region
    $region58: #{dqn_forward.1} parent=1 // pred_check
      _
    $region59: #{dqn_forward.1} parent=1 // pred_check_branch
      %2783 = sbr.rel (0) target = $region61
    $region60: #{dqn_forward.1} parent=1 // pred_region
      %2784 = dma.done [#allocation3], 32
    $region61: #{dqn_forward.1} parent=1 // pred_fallthru
      _
    %2785 = vsyncpa [#allocation3], 1

</llo_original>
